<compile_context>
chip_gen: v7x
topology: tpu7x:2x2x1
jax: 0.10.0
libtpu: 0.0.40
codegen_flags: <defaults>
</compile_context>

<pallas_src>
import functools

import jax
import jax.numpy as jnp
import numpy as np
from jax import lax
from jax.experimental import pallas as pl
from jax.experimental.pallas import tpu as pltpu


# ----------------------------------------------------------------------------
# Fused LSTM + MLP kernel (single gridless invocation, all VMEM-resident).
# ----------------------------------------------------------------------------
def _forecaster_kernel(x_ref, wih_ref, b_ref, whh_ref,
                       w1_ref, b1_ref, w2_ref, b2_ref,
                       out_ref, *, B, T, H):
    # 1) Batched input projection for all T*B rows at once (one big matmul);
    #    combined bias broadcast hoisted out of the recurrent loop.
    xp = jnp.dot(x_ref[...], wih_ref[...],
                 preferred_element_type=jnp.float32) + b_ref[...]   # (T*B, 4H)

    whh = whh_ref[...]                                              # (H, 4H)

    h = jnp.zeros((B, H), jnp.float32)
    c = jnp.zeros((B, H), jnp.float32)
    hs = []

    # 2) Recurrence: T is small and static -> fully unrolled, all-static
    #    slices.  One lane-dense (B,H)@(H,4H) MXU dot per step; gate split is
    #    three static lane slices off the MXU/EUP latency chain.
    for t in range(T):
        r0 = t * B
        gates = xp[r0:r0 + B, :] + jnp.dot(
            h, whh, preferred_element_type=jnp.float32)             # (B, 4H)
        i_g = jax.nn.sigmoid(gates[:, 0 * H:1 * H])
        f_g = jax.nn.sigmoid(gates[:, 1 * H:2 * H])
        g_g = jnp.tanh(gates[:, 2 * H:3 * H])
        o_g = jax.nn.sigmoid(gates[:, 3 * H:4 * H])
        c = f_g * c + i_g * g_g
        h = o_g * jnp.tanh(c)
        hs.append(h)                    # stays in registers, no scratch store

    hall = jnp.concatenate(hs, axis=0)                              # (T*B, H)

    # 3) Fused per-timestep MLP on all T*B hidden rows at once.
    hid = jnp.dot(hall, w1_ref[...],
                  preferred_element_type=jnp.float32) + b1_ref[...]
    hid = jnp.maximum(hid, 0.0)
    y = jnp.dot(hid, w2_ref[...],
                preferred_element_type=jnp.float32) + b2_ref[...]   # (T*B, Op)
    out_ref[...] = y.astype(out_ref.dtype)        # lane-dense unmasked store


# ----------------------------------------------------------------------------
# Forecaster forward (wrapper).
# ----------------------------------------------------------------------------
@jax.jit
def forecaster_forward(x, params):
    B, T, I = x.shape
    H = params["w_hh_t"].shape[0]
    M = params["w1"].shape[1]
    O = params["w2"].shape[1]

    SUBLANE, LANE = 8, 128
    Bp = max(SUBLANE, pl.cdiv(B, SUBLANE) * SUBLANE)   # sublane-full batch
    Op = max(LANE, pl.cdiv(O, LANE) * LANE)            # lane-dense output

    # Time-major layout, batch padded with zero rows (sliced away at the end).
    x_tm = jnp.transpose(x, (1, 0, 2))                               # (T,B,I)
    x_tm = jnp.pad(x_tm, ((0, 0), (0, Bp - B), (0, 0))).reshape(T * Bp, I)

    # Zero-pad the last-layer weights so the output store is 128-lane dense.
    w2p = jnp.pad(params["w2"], ((0, 0), (0, Op - O)))
    b2p = jnp.pad(params["b2"], ((0, 0), (0, Op - O)))

    kernel = functools.partial(_forecaster_kernel, B=Bp, T=T, H=H)
    y_tm = pl.pallas_call(
        kernel,
        out_shape=jax.ShapeDtypeStruct((T * Bp, Op), x.dtype),
        compiler_params=pltpu.CompilerParams(vmem_limit_bytes=32 << 20),
    )(x_tm, params["w_ih_t"], params["b_lstm"], params["w_hh_t"],
      params["w1"], params["b1"], w2p, b2p)

    # Only the small result is transposed/sliced back to batch-major [B,T,O].
    y = y_tm.reshape(T, Bp, Op)[:, :B, :O]
    return jnp.transpose(y, (1, 0, 2))


# ----------------------------------------------------------------------------
# Pure-JAX reference (for correctness checking).
# ----------------------------------------------------------------------------
def forecaster_reference(x, params):
    B, T, _ = x.shape
    H = params["w_hh_t"].shape[0]

    def step(carry, x_t):
        h_prev, c_prev = carry
        gates = (x_t @ params["w_ih_t"] + h_prev @ params["w_hh_t"]
                 + params["b_lstm"][0])
        i_g = jax.nn.sigmoid(gates[:, 0 * H:1 * H])
        f_g = jax.nn.sigmoid(gates[:, 1 * H:2 * H])
        g_g = jnp.tanh(gates[:, 2 * H:3 * H])
        o_g = jax.nn.sigmoid(gates[:, 3 * H:4 * H])
        c_new = f_g * c_prev + i_g * g_g
        h_new = o_g * jnp.tanh(c_new)
        return (h_new, c_new), h_new

    h0 = jnp.zeros((B, H), jnp.float32)
    _, hs = lax.scan(step, (h0, h0), jnp.transpose(x, (1, 0, 2)))
    h = jnp.transpose(hs, (1, 0, 2)).reshape(B * T, H)
    m = jnp.maximum(h @ params["w1"] + params["b1"][0], 0.0)
    y = m @ params["w2"] + params["b2"][0]
    return y.reshape(B, T, -1)


# ----------------------------------------------------------------------------
# Main
# ----------------------------------------------------------------------------
if __name__ == "__main__":
    B, T = 2, 8
    INPUT_SIZE = 16
    HIDDEN_SIZE = 32       # LSTM hidden size -> 4H = 128 (lane aligned)
    MLP_HIDDEN = 64
    OUTPUT_SIZE = 8

    key = jax.random.PRNGKey(0)
    keys = jax.random.split(key, 8)
    scale = 0.1

    params = {
        # LSTM weights stored pre-transposed: [I, 4H], [H, 4H].
        "w_ih_t": scale * jax.random.normal(
            keys[0], (INPUT_SIZE, 4 * HIDDEN_SIZE), jnp.float32),
        "w_hh_t": scale * jax.random.normal(
            keys[1], (HIDDEN_SIZE, 4 * HIDDEN_SIZE), jnp.float32),
        # Combined bias b_ih + b_hh, kept 2D for broadcast.
        "b_lstm": scale * jax.random.normal(
            keys[2], (1, 4 * HIDDEN_SIZE), jnp.float32),
        # MLP: Linear(H, M) -> ReLU -> Linear(M, O)
        "w1": scale * jax.random.normal(
            keys[3], (HIDDEN_SIZE, MLP_HIDDEN), jnp.float32),
        "b1": scale * jax.random.normal(keys[4], (1, MLP_HIDDEN), jnp.float32),
        "w2": scale * jax.random.normal(
            keys[5], (MLP_HIDDEN, OUTPUT_SIZE), jnp.float32),
        "b2": scale * jax.random.normal(keys[6], (1, OUTPUT_SIZE), jnp.float32),
    }

    x = jax.random.normal(keys[7], (B, T, INPUT_SIZE), jnp.float32)

    out = forecaster_forward(x, params)
    out = jax.block_until_ready(out)

    ref = forecaster_reference(x, params)
    np.testing.assert_allclose(np.asarray(out), np.asarray(ref),
                               rtol=1e-4, atol=1e-4)
    assert out.shape == (B, T, OUTPUT_SIZE)

    print("KERNEL_OK")
</pallas_src>

<mosaic_0001>
module attributes {stable_mosaic.version = 11 : i64} {
  func.func @_forecaster_kernel(%arg0: memref<64x16xf32, #tpu.memory_space<vmem>>, %arg1: memref<16x128xf32, #tpu.memory_space<vmem>>, %arg2: memref<1x128xf32, #tpu.memory_space<vmem>>, %arg3: memref<32x128xf32, #tpu.memory_space<vmem>>, %arg4: memref<32x64xf32, #tpu.memory_space<vmem>>, %arg5: memref<1x64xf32, #tpu.memory_space<vmem>>, %arg6: memref<64x128xf32, #tpu.memory_space<vmem>>, %arg7: memref<1x128xf32, #tpu.memory_space<vmem>>, %arg8: memref<64x128xf32, #tpu.memory_space<vmem>>) attributes {dimension_semantics = [], scalar_prefetch = 0 : i64, scratch_operands = 0 : i64, tpu.core_type = #tpu.core_type<tc>} {
    %c0 = arith.constant 0 : index
    %c0_0 = arith.constant 0 : index
    %0 = vector.load %arg0[%c0, %c0_0] : memref<64x16xf32, #tpu.memory_space<vmem>>, vector<64x16xf32>
    %c0_1 = arith.constant 0 : index
    %c0_2 = arith.constant 0 : index
    %1 = vector.load %arg1[%c0_1, %c0_2] : memref<16x128xf32, #tpu.memory_space<vmem>>, vector<16x128xf32>
    %cst = arith.constant dense<0.000000e+00> : vector<64x128xf32>
    %2 = tpu.matmul %0, %1, %cst {dimension_numbers = #tpu.dot_dimension_numbers<[1], [0], [0], [1], [0, 0, 1, 1], [], []>} : vector<64x16xf32>, vector<16x128xf32>, vector<64x128xf32> -> vector<64x128xf32>
    %c0_3 = arith.constant 0 : index
    %c0_4 = arith.constant 0 : index
    %3 = vector.load %arg2[%c0_3, %c0_4] : memref<1x128xf32, #tpu.memory_space<vmem>>, vector<1x128xf32>
    %4 = vector.broadcast %3 : vector<1x128xf32> to vector<64x128xf32>
    %5 = arith.addf %2, %4 : vector<64x128xf32>
    %c0_5 = arith.constant 0 : index
    %c0_6 = arith.constant 0 : index
    %6 = vector.load %arg3[%c0_5, %c0_6] : memref<32x128xf32, #tpu.memory_space<vmem>>, vector<32x128xf32>
    %cst_7 = arith.constant 0.000000e+00 : f32
    %7 = vector.broadcast %cst_7 : f32 to vector<8x32xf32>
    %cst_8 = arith.constant 0.000000e+00 : f32
    %8 = vector.broadcast %cst_8 : f32 to vector<8x32xf32>
    %9 = vector.extract_strided_slice %5 {offsets = [0, 0], sizes = [8, 128], strides = [1, 1]} : vector<64x128xf32> to vector<8x128xf32>
    %cst_9 = arith.constant dense<0.000000e+00> : vector<8x128xf32>
    %10 = tpu.matmul %7, %6, %cst_9 {dimension_numbers = #tpu.dot_dimension_numbers<[1], [0], [0], [1], [0, 0, 1, 1], [], []>} : vector<8x32xf32>, vector<32x128xf32>, vector<8x128xf32> -> vector<8x128xf32>
    %11 = arith.addf %9, %10 : vector<8x128xf32>
    %12 = vector.extract_strided_slice %11 {offsets = [0, 0], sizes = [8, 32], strides = [1, 1]} : vector<8x128xf32> to vector<8x32xf32>
    %13 = arith.negf %12 : vector<8x32xf32>
    %14 = math.exp %13 : vector<8x32xf32>
    %cst_10 = arith.constant 1.000000e+00 : f32
    %15 = vector.broadcast %cst_10 : f32 to vector<8x32xf32>
    %16 = arith.addf %15, %14 : vector<8x32xf32>
    %17 = arith.divf %15, %16 : vector<8x32xf32>
    %18 = vector.extract_strided_slice %11 {offsets = [0, 32], sizes = [8, 32], strides = [1, 1]} : vector<8x128xf32> to vector<8x32xf32>
    %19 = arith.negf %18 : vector<8x32xf32>
    %20 = math.exp %19 : vector<8x32xf32>
    %cst_11 = arith.constant 1.000000e+00 : f32
    %21 = vector.broadcast %cst_11 : f32 to vector<8x32xf32>
    %22 = arith.addf %21, %20 : vector<8x32xf32>
    %23 = arith.divf %21, %22 : vector<8x32xf32>
    %24 = vector.extract_strided_slice %11 {offsets = [0, 64], sizes = [8, 32], strides = [1, 1]} : vector<8x128xf32> to vector<8x32xf32>
    %25 = math.tanh %24 : vector<8x32xf32>
    %26 = vector.extract_strided_slice %11 {offsets = [0, 96], sizes = [8, 32], strides = [1, 1]} : vector<8x128xf32> to vector<8x32xf32>
    %27 = arith.negf %26 : vector<8x32xf32>
    %28 = math.exp %27 : vector<8x32xf32>
    %cst_12 = arith.constant 1.000000e+00 : f32
    %29 = vector.broadcast %cst_12 : f32 to vector<8x32xf32>
    %30 = arith.addf %29, %28 : vector<8x32xf32>
    %31 = arith.divf %29, %30 : vector<8x32xf32>
    %32 = arith.mulf %23, %8 : vector<8x32xf32>
    %33 = arith.mulf %17, %25 : vector<8x32xf32>
    %34 = arith.addf %32, %33 : vector<8x32xf32>
    %35 = math.tanh %34 : vector<8x32xf32>
    %36 = arith.mulf %31, %35 : vector<8x32xf32>
    %37 = vector.extract_strided_slice %5 {offsets = [8, 0], sizes = [8, 128], strides = [1, 1]} : vector<64x128xf32> to vector<8x128xf32>
    %cst_13 = arith.constant dense<0.000000e+00> : vector<8x128xf32>
    %38 = tpu.matmul %36, %6, %cst_13 {dimension_numbers = #tpu.dot_dimension_numbers<[1], [0], [0], [1], [0, 0, 1, 1], [], []>} : vector<8x32xf32>, vector<32x128xf32>, vector<8x128xf32> -> vector<8x128xf32>
    %39 = arith.addf %37, %38 : vector<8x128xf32>
    %40 = vector.extract_strided_slice %39 {offsets = [0, 0], sizes = [8, 32], strides = [1, 1]} : vector<8x128xf32> to vector<8x32xf32>
    %41 = arith.negf %40 : vector<8x32xf32>
    %42 = math.exp %41 : vector<8x32xf32>
    %cst_14 = arith.constant 1.000000e+00 : f32
    %43 = vector.broadcast %cst_14 : f32 to vector<8x32xf32>
    %44 = arith.addf %43, %42 : vector<8x32xf32>
    %45 = arith.divf %43, %44 : vector<8x32xf32>
    %46 = vector.extract_strided_slice %39 {offsets = [0, 32], sizes = [8, 32], strides = [1, 1]} : vector<8x128xf32> to vector<8x32xf32>
    %47 = arith.negf %46 : vector<8x32xf32>
    %48 = math.exp %47 : vector<8x32xf32>
    %cst_15 = arith.constant 1.000000e+00 : f32
    %49 = vector.broadcast %cst_15 : f32 to vector<8x32xf32>
    %50 = arith.addf %49, %48 : vector<8x32xf32>
    %51 = arith.divf %49, %50 : vector<8x32xf32>
    %52 = vector.extract_strided_slice %39 {offsets = [0, 64], sizes = [8, 32], strides = [1, 1]} : vector<8x128xf32> to vector<8x32xf32>
    %53 = math.tanh %52 : vector<8x32xf32>
    %54 = vector.extract_strided_slice %39 {offsets = [0, 96], sizes = [8, 32], strides = [1, 1]} : vector<8x128xf32> to vector<8x32xf32>
    %55 = arith.negf %54 : vector<8x32xf32>
    %56 = math.exp %55 : vector<8x32xf32>
    %cst_16 = arith.constant 1.000000e+00 : f32
    %57 = vector.broadcast %cst_16 : f32 to vector<8x32xf32>
    %58 = arith.addf %57, %56 : vector<8x32xf32>
    %59 = arith.divf %57, %58 : vector<8x32xf32>
    %60 = arith.mulf %51, %34 : vector<8x32xf32>
    %61 = arith.mulf %45, %53 : vector<8x32xf32>
    %62 = arith.addf %60, %61 : vector<8x32xf32>
    %63 = math.tanh %62 : vector<8x32xf32>
    %64 = arith.mulf %59, %63 : vector<8x32xf32>
    %65 = vector.extract_strided_slice %5 {offsets = [16, 0], sizes = [8, 128], strides = [1, 1]} : vector<64x128xf32> to vector<8x128xf32>
    %cst_17 = arith.constant dense<0.000000e+00> : vector<8x128xf32>
    %66 = tpu.matmul %64, %6, %cst_17 {dimension_numbers = #tpu.dot_dimension_numbers<[1], [0], [0], [1], [0, 0, 1, 1], [], []>} : vector<8x32xf32>, vector<32x128xf32>, vector<8x128xf32> -> vector<8x128xf32>
    %67 = arith.addf %65, %66 : vector<8x128xf32>
    %68 = vector.extract_strided_slice %67 {offsets = [0, 0], sizes = [8, 32], strides = [1, 1]} : vector<8x128xf32> to vector<8x32xf32>
    %69 = arith.negf %68 : vector<8x32xf32>
    %70 = math.exp %69 : vector<8x32xf32>
    %cst_18 = arith.constant 1.000000e+00 : f32
    %71 = vector.broadcast %cst_18 : f32 to vector<8x32xf32>
    %72 = arith.addf %71, %70 : vector<8x32xf32>
    %73 = arith.divf %71, %72 : vector<8x32xf32>
    %74 = vector.extract_strided_slice %67 {offsets = [0, 32], sizes = [8, 32], strides = [1, 1]} : vector<8x128xf32> to vector<8x32xf32>
    %75 = arith.negf %74 : vector<8x32xf32>
    %76 = math.exp %75 : vector<8x32xf32>
    %cst_19 = arith.constant 1.000000e+00 : f32
    %77 = vector.broadcast %cst_19 : f32 to vector<8x32xf32>
    %78 = arith.addf %77, %76 : vector<8x32xf32>
    %79 = arith.divf %77, %78 : vector<8x32xf32>
    %80 = vector.extract_strided_slice %67 {offsets = [0, 64], sizes = [8, 32], strides = [1, 1]} : vector<8x128xf32> to vector<8x32xf32>
    %81 = math.tanh %80 : vector<8x32xf32>
    %82 = vector.extract_strided_slice %67 {offsets = [0, 96], sizes = [8, 32], strides = [1, 1]} : vector<8x128xf32> to vector<8x32xf32>
    %83 = arith.negf %82 : vector<8x32xf32>
    %84 = math.exp %83 : vector<8x32xf32>
    %cst_20 = arith.constant 1.000000e+00 : f32
    %85 = vector.broadcast %cst_20 : f32 to vector<8x32xf32>
    %86 = arith.addf %85, %84 : vector<8x32xf32>
    %87 = arith.divf %85, %86 : vector<8x32xf32>
    %88 = arith.mulf %79, %62 : vector<8x32xf32>
    %89 = arith.mulf %73, %81 : vector<8x32xf32>
    %90 = arith.addf %88, %89 : vector<8x32xf32>
    %91 = math.tanh %90 : vector<8x32xf32>
    %92 = arith.mulf %87, %91 : vector<8x32xf32>
    %93 = vector.extract_strided_slice %5 {offsets = [24, 0], sizes = [8, 128], strides = [1, 1]} : vector<64x128xf32> to vector<8x128xf32>
    %cst_21 = arith.constant dense<0.000000e+00> : vector<8x128xf32>
    %94 = tpu.matmul %92, %6, %cst_21 {dimension_numbers = #tpu.dot_dimension_numbers<[1], [0], [0], [1], [0, 0, 1, 1], [], []>} : vector<8x32xf32>, vector<32x128xf32>, vector<8x128xf32> -> vector<8x128xf32>
    %95 = arith.addf %93, %94 : vector<8x128xf32>
    %96 = vector.extract_strided_slice %95 {offsets = [0, 0], sizes = [8, 32], strides = [1, 1]} : vector<8x128xf32> to vector<8x32xf32>
    %97 = arith.negf %96 : vector<8x32xf32>
    %98 = math.exp %97 : vector<8x32xf32>
    %cst_22 = arith.constant 1.000000e+00 : f32
    %99 = vector.broadcast %cst_22 : f32 to vector<8x32xf32>
    %100 = arith.addf %99, %98 : vector<8x32xf32>
    %101 = arith.divf %99, %100 : vector<8x32xf32>
    %102 = vector.extract_strided_slice %95 {offsets = [0, 32], sizes = [8, 32], strides = [1, 1]} : vector<8x128xf32> to vector<8x32xf32>
    %103 = arith.negf %102 : vector<8x32xf32>
    %104 = math.exp %103 : vector<8x32xf32>
    %cst_23 = arith.constant 1.000000e+00 : f32
    %105 = vector.broadcast %cst_23 : f32 to vector<8x32xf32>
    %106 = arith.addf %105, %104 : vector<8x32xf32>
    %107 = arith.divf %105, %106 : vector<8x32xf32>
    %108 = vector.extract_strided_slice %95 {offsets = [0, 64], sizes = [8, 32], strides = [1, 1]} : vector<8x128xf32> to vector<8x32xf32>
    %109 = math.tanh %108 : vector<8x32xf32>
    %110 = vector.extract_strided_slice %95 {offsets = [0, 96], sizes = [8, 32], strides = [1, 1]} : vector<8x128xf32> to vector<8x32xf32>
    %111 = arith.negf %110 : vector<8x32xf32>
    %112 = math.exp %111 : vector<8x32xf32>
    %cst_24 = arith.constant 1.000000e+00 : f32
    %113 = vector.broadcast %cst_24 : f32 to vector<8x32xf32>
    %114 = arith.addf %113, %112 : vector<8x32xf32>
    %115 = arith.divf %113, %114 : vector<8x32xf32>
    %116 = arith.mulf %107, %90 : vector<8x32xf32>
    %117 = arith.mulf %101, %109 : vector<8x32xf32>
    %118 = arith.addf %116, %117 : vector<8x32xf32>
    %119 = math.tanh %118 : vector<8x32xf32>
    %120 = arith.mulf %115, %119 : vector<8x32xf32>
    %121 = vector.extract_strided_slice %5 {offsets = [32, 0], sizes = [8, 128], strides = [1, 1]} : vector<64x128xf32> to vector<8x128xf32>
    %cst_25 = arith.constant dense<0.000000e+00> : vector<8x128xf32>
    %122 = tpu.matmul %120, %6, %cst_25 {dimension_numbers = #tpu.dot_dimension_numbers<[1], [0], [0], [1], [0, 0, 1, 1], [], []>} : vector<8x32xf32>, vector<32x128xf32>, vector<8x128xf32> -> vector<8x128xf32>
    %123 = arith.addf %121, %122 : vector<8x128xf32>
    %124 = vector.extract_strided_slice %123 {offsets = [0, 0], sizes = [8, 32], strides = [1, 1]} : vector<8x128xf32> to vector<8x32xf32>
    %125 = arith.negf %124 : vector<8x32xf32>
    %126 = math.exp %125 : vector<8x32xf32>
    %cst_26 = arith.constant 1.000000e+00 : f32
    %127 = vector.broadcast %cst_26 : f32 to vector<8x32xf32>
    %128 = arith.addf %127, %126 : vector<8x32xf32>
    %129 = arith.divf %127, %128 : vector<8x32xf32>
    %130 = vector.extract_strided_slice %123 {offsets = [0, 32], sizes = [8, 32], strides = [1, 1]} : vector<8x128xf32> to vector<8x32xf32>
    %131 = arith.negf %130 : vector<8x32xf32>
    %132 = math.exp %131 : vector<8x32xf32>
    %cst_27 = arith.constant 1.000000e+00 : f32
    %133 = vector.broadcast %cst_27 : f32 to vector<8x32xf32>
    %134 = arith.addf %133, %132 : vector<8x32xf32>
    %135 = arith.divf %133, %134 : vector<8x32xf32>
    %136 = vector.extract_strided_slice %123 {offsets = [0, 64], sizes = [8, 32], strides = [1, 1]} : vector<8x128xf32> to vector<8x32xf32>
    %137 = math.tanh %136 : vector<8x32xf32>
    %138 = vector.extract_strided_slice %123 {offsets = [0, 96], sizes = [8, 32], strides = [1, 1]} : vector<8x128xf32> to vector<8x32xf32>
    %139 = arith.negf %138 : vector<8x32xf32>
    %140 = math.exp %139 : vector<8x32xf32>
    %cst_28 = arith.constant 1.000000e+00 : f32
    %141 = vector.broadcast %cst_28 : f32 to vector<8x32xf32>
    %142 = arith.addf %141, %140 : vector<8x32xf32>
    %143 = arith.divf %141, %142 : vector<8x32xf32>
    %144 = arith.mulf %135, %118 : vector<8x32xf32>
    %145 = arith.mulf %129, %137 : vector<8x32xf32>
    %146 = arith.addf %144, %145 : vector<8x32xf32>
    %147 = math.tanh %146 : vector<8x32xf32>
    %148 = arith.mulf %143, %147 : vector<8x32xf32>
    %149 = vector.extract_strided_slice %5 {offsets = [40, 0], sizes = [8, 128], strides = [1, 1]} : vector<64x128xf32> to vector<8x128xf32>
    %cst_29 = arith.constant dense<0.000000e+00> : vector<8x128xf32>
    %150 = tpu.matmul %148, %6, %cst_29 {dimension_numbers = #tpu.dot_dimension_numbers<[1], [0], [0], [1], [0, 0, 1, 1], [], []>} : vector<8x32xf32>, vector<32x128xf32>, vector<8x128xf32> -> vector<8x128xf32>
    %151 = arith.addf %149, %150 : vector<8x128xf32>
    %152 = vector.extract_strided_slice %151 {offsets = [0, 0], sizes = [8, 32], strides = [1, 1]} : vector<8x128xf32> to vector<8x32xf32>
    %153 = arith.negf %152 : vector<8x32xf32>
    %154 = math.exp %153 : vector<8x32xf32>
    %cst_30 = arith.constant 1.000000e+00 : f32
    %155 = vector.broadcast %cst_30 : f32 to vector<8x32xf32>
    %156 = arith.addf %155, %154 : vector<8x32xf32>
    %157 = arith.divf %155, %156 : vector<8x32xf32>
    %158 = vector.extract_strided_slice %151 {offsets = [0, 32], sizes = [8, 32], strides = [1, 1]} : vector<8x128xf32> to vector<8x32xf32>
    %159 = arith.negf %158 : vector<8x32xf32>
    %160 = math.exp %159 : vector<8x32xf32>
    %cst_31 = arith.constant 1.000000e+00 : f32
    %161 = vector.broadcast %cst_31 : f32 to vector<8x32xf32>
    %162 = arith.addf %161, %160 : vector<8x32xf32>
    %163 = arith.divf %161, %162 : vector<8x32xf32>
    %164 = vector.extract_strided_slice %151 {offsets = [0, 64], sizes = [8, 32], strides = [1, 1]} : vector<8x128xf32> to vector<8x32xf32>
    %165 = math.tanh %164 : vector<8x32xf32>
    %166 = vector.extract_strided_slice %151 {offsets = [0, 96], sizes = [8, 32], strides = [1, 1]} : vector<8x128xf32> to vector<8x32xf32>
    %167 = arith.negf %166 : vector<8x32xf32>
    %168 = math.exp %167 : vector<8x32xf32>
    %cst_32 = arith.constant 1.000000e+00 : f32
    %169 = vector.broadcast %cst_32 : f32 to vector<8x32xf32>
    %170 = arith.addf %169, %168 : vector<8x32xf32>
    %171 = arith.divf %169, %170 : vector<8x32xf32>
    %172 = arith.mulf %163, %146 : vector<8x32xf32>
    %173 = arith.mulf %157, %165 : vector<8x32xf32>
    %174 = arith.addf %172, %173 : vector<8x32xf32>
    %175 = math.tanh %174 : vector<8x32xf32>
    %176 = arith.mulf %171, %175 : vector<8x32xf32>
    %177 = vector.extract_strided_slice %5 {offsets = [48, 0], sizes = [8, 128], strides = [1, 1]} : vector<64x128xf32> to vector<8x128xf32>
    %cst_33 = arith.constant dense<0.000000e+00> : vector<8x128xf32>
    %178 = tpu.matmul %176, %6, %cst_33 {dimension_numbers = #tpu.dot_dimension_numbers<[1], [0], [0], [1], [0, 0, 1, 1], [], []>} : vector<8x32xf32>, vector<32x128xf32>, vector<8x128xf32> -> vector<8x128xf32>
    %179 = arith.addf %177, %178 : vector<8x128xf32>
    %180 = vector.extract_strided_slice %179 {offsets = [0, 0], sizes = [8, 32], strides = [1, 1]} : vector<8x128xf32> to vector<8x32xf32>
    %181 = arith.negf %180 : vector<8x32xf32>
    %182 = math.exp %181 : vector<8x32xf32>
    %cst_34 = arith.constant 1.000000e+00 : f32
    %183 = vector.broadcast %cst_34 : f32 to vector<8x32xf32>
    %184 = arith.addf %183, %182 : vector<8x32xf32>
    %185 = arith.divf %183, %184 : vector<8x32xf32>
    %186 = vector.extract_strided_slice %179 {offsets = [0, 32], sizes = [8, 32], strides = [1, 1]} : vector<8x128xf32> to vector<8x32xf32>
    %187 = arith.negf %186 : vector<8x32xf32>
    %188 = math.exp %187 : vector<8x32xf32>
    %cst_35 = arith.constant 1.000000e+00 : f32
    %189 = vector.broadcast %cst_35 : f32 to vector<8x32xf32>
    %190 = arith.addf %189, %188 : vector<8x32xf32>
    %191 = arith.divf %189, %190 : vector<8x32xf32>
    %192 = vector.extract_strided_slice %179 {offsets = [0, 64], sizes = [8, 32], strides = [1, 1]} : vector<8x128xf32> to vector<8x32xf32>
    %193 = math.tanh %192 : vector<8x32xf32>
    %194 = vector.extract_strided_slice %179 {offsets = [0, 96], sizes = [8, 32], strides = [1, 1]} : vector<8x128xf32> to vector<8x32xf32>
    %195 = arith.negf %194 : vector<8x32xf32>
    %196 = math.exp %195 : vector<8x32xf32>
    %cst_36 = arith.constant 1.000000e+00 : f32
    %197 = vector.broadcast %cst_36 : f32 to vector<8x32xf32>
    %198 = arith.addf %197, %196 : vector<8x32xf32>
    %199 = arith.divf %197, %198 : vector<8x32xf32>
    %200 = arith.mulf %191, %174 : vector<8x32xf32>
    %201 = arith.mulf %185, %193 : vector<8x32xf32>
    %202 = arith.addf %200, %201 : vector<8x32xf32>
    %203 = math.tanh %202 : vector<8x32xf32>
    %204 = arith.mulf %199, %203 : vector<8x32xf32>
    %205 = vector.extract_strided_slice %5 {offsets = [56, 0], sizes = [8, 128], strides = [1, 1]} : vector<64x128xf32> to vector<8x128xf32>
    %cst_37 = arith.constant dense<0.000000e+00> : vector<8x128xf32>
    %206 = tpu.matmul %204, %6, %cst_37 {dimension_numbers = #tpu.dot_dimension_numbers<[1], [0], [0], [1], [0, 0, 1, 1], [], []>} : vector<8x32xf32>, vector<32x128xf32>, vector<8x128xf32> -> vector<8x128xf32>
    %207 = arith.addf %205, %206 : vector<8x128xf32>
    %208 = vector.extract_strided_slice %207 {offsets = [0, 0], sizes = [8, 32], strides = [1, 1]} : vector<8x128xf32> to vector<8x32xf32>
    %209 = arith.negf %208 : vector<8x32xf32>
    %210 = math.exp %209 : vector<8x32xf32>
    %cst_38 = arith.constant 1.000000e+00 : f32
    %211 = vector.broadcast %cst_38 : f32 to vector<8x32xf32>
    %212 = arith.addf %211, %210 : vector<8x32xf32>
    %213 = arith.divf %211, %212 : vector<8x32xf32>
    %214 = vector.extract_strided_slice %207 {offsets = [0, 32], sizes = [8, 32], strides = [1, 1]} : vector<8x128xf32> to vector<8x32xf32>
    %215 = arith.negf %214 : vector<8x32xf32>
    %216 = math.exp %215 : vector<8x32xf32>
    %cst_39 = arith.constant 1.000000e+00 : f32
    %217 = vector.broadcast %cst_39 : f32 to vector<8x32xf32>
    %218 = arith.addf %217, %216 : vector<8x32xf32>
    %219 = arith.divf %217, %218 : vector<8x32xf32>
    %220 = vector.extract_strided_slice %207 {offsets = [0, 64], sizes = [8, 32], strides = [1, 1]} : vector<8x128xf32> to vector<8x32xf32>
    %221 = math.tanh %220 : vector<8x32xf32>
    %222 = vector.extract_strided_slice %207 {offsets = [0, 96], sizes = [8, 32], strides = [1, 1]} : vector<8x128xf32> to vector<8x32xf32>
    %223 = arith.negf %222 : vector<8x32xf32>
    %224 = math.exp %223 : vector<8x32xf32>
    %cst_40 = arith.constant 1.000000e+00 : f32
    %225 = vector.broadcast %cst_40 : f32 to vector<8x32xf32>
    %226 = arith.addf %225, %224 : vector<8x32xf32>
    %227 = arith.divf %225, %226 : vector<8x32xf32>
    %228 = arith.mulf %219, %202 : vector<8x32xf32>
    %229 = arith.mulf %213, %221 : vector<8x32xf32>
    %230 = arith.addf %228, %229 : vector<8x32xf32>
    %231 = math.tanh %230 : vector<8x32xf32>
    %232 = arith.mulf %227, %231 : vector<8x32xf32>
    %233 = tpu.concatenate %36, %64, %92, %120, %148, %176, %204, %232 in 0 : vector<8x32xf32>, vector<8x32xf32>, vector<8x32xf32>, vector<8x32xf32>, vector<8x32xf32>, vector<8x32xf32>, vector<8x32xf32>, vector<8x32xf32> -> vector<64x32xf32>
    %c0_41 = arith.constant 0 : index
    %c0_42 = arith.constant 0 : index
    %234 = vector.load %arg4[%c0_41, %c0_42] : memref<32x64xf32, #tpu.memory_space<vmem>>, vector<32x64xf32>
    %cst_43 = arith.constant dense<0.000000e+00> : vector<64x64xf32>
    %235 = tpu.matmul %233, %234, %cst_43 {dimension_numbers = #tpu.dot_dimension_numbers<[1], [0], [0], [1], [0, 0, 1, 1], [], []>} : vector<64x32xf32>, vector<32x64xf32>, vector<64x64xf32> -> vector<64x64xf32>
    %c0_44 = arith.constant 0 : index
    %c0_45 = arith.constant 0 : index
    %236 = vector.load %arg5[%c0_44, %c0_45] : memref<1x64xf32, #tpu.memory_space<vmem>>, vector<1x64xf32>
    %237 = vector.broadcast %236 : vector<1x64xf32> to vector<64x64xf32>
    %238 = arith.addf %235, %237 : vector<64x64xf32>
    %cst_46 = arith.constant 0.000000e+00 : f32
    %239 = vector.broadcast %cst_46 : f32 to vector<64x64xf32>
    %240 = arith.maximumf %238, %239 : vector<64x64xf32>
    %c0_47 = arith.constant 0 : index
    %c0_48 = arith.constant 0 : index
    %241 = vector.load %arg6[%c0_47, %c0_48] : memref<64x128xf32, #tpu.memory_space<vmem>>, vector<64x128xf32>
    %cst_49 = arith.constant dense<0.000000e+00> : vector<64x128xf32>
    %242 = tpu.matmul %240, %241, %cst_49 {dimension_numbers = #tpu.dot_dimension_numbers<[1], [0], [0], [1], [0, 0, 1, 1], [], []>} : vector<64x64xf32>, vector<64x128xf32>, vector<64x128xf32> -> vector<64x128xf32>
    %c0_50 = arith.constant 0 : index
    %c0_51 = arith.constant 0 : index
    %243 = vector.load %arg7[%c0_50, %c0_51] : memref<1x128xf32, #tpu.memory_space<vmem>>, vector<1x128xf32>
    %244 = vector.broadcast %243 : vector<1x128xf32> to vector<64x128xf32>
    %245 = arith.addf %242, %244 : vector<64x128xf32>
    %c0_52 = arith.constant 0 : index
    %c0_53 = arith.constant 0 : index
    %246 = vector.load %arg8[%c0_52, %c0_53] : memref<64x128xf32, #tpu.memory_space<vmem>>, vector<64x128xf32>
    tpu.vector_store %arg8[%c0_52, %c0_53], %245 {strides = array<i32>} : memref<64x128xf32, #tpu.memory_space<vmem>>, vector<64x128xf32>,
    return
  }
}

</mosaic_0001>

<llo_original>
// kernel: forecaster_forward.1
$region0: #{forecaster_forward.1}
  #allocation0 [shape = 'u32[]', space=smem, size = 0x4, offset = 0x4, fixed_abs, tag = 'smem constant byte address 0x4 - core index']
  #allocation1 [shape = 'u32[144,128]{1,0:T(1,128)}', space=vmem, size = 0x12000, scoped, tag = 'internal scratch']
  %s0 = inlined_call_operand.vmem [shape: f32[64,16], index: 0, kind: input, shape index: {}]
  %s1 = inlined_call_operand.vmem [shape: f32[16,128], index: 1, kind: input, shape index: {}]
  %s2 = inlined_call_operand.vmem [shape: f32[1,128], index: 2, kind: input, shape index: {}]
  %s3 = inlined_call_operand.vmem [shape: f32[32,128], index: 3, kind: input, shape index: {}]
  %s4 = inlined_call_operand.vmem [shape: f32[32,64], index: 4, kind: input, shape index: {}]
  %s5 = inlined_call_operand.vmem [shape: f32[1,64], index: 5, kind: input, shape index: {}]
  %s6 = inlined_call_operand.vmem [shape: f32[64,128], index: 6, kind: input, shape index: {}]
  %s7 = inlined_call_operand.vmem [shape: f32[1,128], index: 7, kind: input, shape index: {}]
  %s8 = inlined_call_operand.vmem [shape: f32[64,128], index: 8, kind: output, shape index: {}]
  %s9 = sld [smem:[#allocation0]]
  $region42: #{forecaster_forward.1} parent=0
    _
  %s11 = ssub.s32 1, %s9
  %s12 = scalar_select 0, %s11, %s9
  // Predicated region
  $region2: #{forecaster_forward.1} parent=0 // pred_check
    _
  $region3: #{forecaster_forward.1} parent=0 // pred_check_branch
    %14 = sbr.rel (0) target = $region5
  $region4: #{forecaster_forward.1} parent=0 // pred_region
    _
  $region5: #{forecaster_forward.1} parent=0 // pred_fallthru
    _
  // Predicated region
  $region6: #{forecaster_forward.1} parent=0 // pred_check
    _
  $region7: #{forecaster_forward.1} parent=0 // pred_check_branch
    %16 = sbr.rel (0) target = $region9
  $region8: #{forecaster_forward.1} parent=0 // pred_region
    _
  $region9: #{forecaster_forward.1} parent=0 // pred_fallthru
    _
  // Predicated region
  $region10: #{forecaster_forward.1} parent=0 // pred_check
    _
  $region11: #{forecaster_forward.1} parent=0 // pred_check_branch
    %18 = sbr.rel (0) target = $region13
  $region12: #{forecaster_forward.1} parent=0 // pred_region
    _
  $region13: #{forecaster_forward.1} parent=0 // pred_fallthru
    _
  // Predicated region
  $region14: #{forecaster_forward.1} parent=0 // pred_check
    _
  $region15: #{forecaster_forward.1} parent=0 // pred_check_branch
    %20 = sbr.rel (0) target = $region17
  $region16: #{forecaster_forward.1} parent=0 // pred_region
    _
  $region17: #{forecaster_forward.1} parent=0 // pred_fallthru
    _
  // Predicated region
  $region18: #{forecaster_forward.1} parent=0 // pred_check
    _
  $region19: #{forecaster_forward.1} parent=0 // pred_check_branch
    %22 = sbr.rel (0) target = $region21
  $region20: #{forecaster_forward.1} parent=0 // pred_region
    _
  $region21: #{forecaster_forward.1} parent=0 // pred_fallthru
    _
  // Predicated region
  $region22: #{forecaster_forward.1} parent=0 // pred_check
    _
  $region23: #{forecaster_forward.1} parent=0 // pred_check_branch
    %24 = sbr.rel (0) target = $region25
  $region24: #{forecaster_forward.1} parent=0 // pred_region
    _
  $region25: #{forecaster_forward.1} parent=0 // pred_fallthru
    _
  // Predicated region
  $region26: #{forecaster_forward.1} parent=0 // pred_check
    _
  $region27: #{forecaster_forward.1} parent=0 // pred_check_branch
    %26 = sbr.rel (0) target = $region29
  $region28: #{forecaster_forward.1} parent=0 // pred_region
    _
  $region29: #{forecaster_forward.1} parent=0 // pred_fallthru
    _
  // Predicated region
  $region30: #{forecaster_forward.1} parent=0 // pred_check
    _
  $region31: #{forecaster_forward.1} parent=0 // pred_check_branch
    %28 = sbr.rel (0) target = $region33
  $region32: #{forecaster_forward.1} parent=0 // pred_region
    _
  $region33: #{forecaster_forward.1} parent=0 // pred_fallthru
    _
  %v29 = vld [vmem:[%s0] sm:$0xff]
  %v30 = vld [vmem:[%s0 + $0x8] sm:$0xff]
  %v31 = vld [vmem:[%s0 + $0x10] sm:$0xff]
  %v32 = vld [vmem:[%s0 + $0x18] sm:$0xff]
  %v33 = vld [vmem:[%s0 + $0x20] sm:$0xff]
  %v34 = vld [vmem:[%s0 + $0x28] sm:$0xff]
  %v35 = vld [vmem:[%s0 + $0x30] sm:$0xff]
  %v36 = vld [vmem:[%s0 + $0x38] sm:$0xff]
  %v37 = vld [vmem:[%s1] sm:$0xff]
  %v38 = vld [vmem:[%s1 + $0x8] sm:$0xff]
  %v39 = vld [vmem:[%s2] sm:$0x1]
  %v41 = vlaneseq
  %v42 = vshrl.u32 %v41, 7
  %v43 = vsub.s32 0, %v42
  %v44 = vrot.slane %v39, %v43
  %vm46 = vcmask 130048
  %v48 = vsel %vm46, %v29, 0
  %v51 = vsel %vm46, %v30, 0
  %v54 = vsel %vm46, %v31, 0
  %v57 = vsel %vm46, %v32, 0
  %v60 = vsel %vm46, %v33, 0
  %v63 = vsel %vm46, %v34, 0
  %v66 = vsel %vm46, %v35, 0
  %v69 = vsel %vm46, %v36, 0
  %71 = vmatprep.subr.mxu0 0.0
  %72 = vmatpush1.msra.mxu0 %v37
  %73 = vmatprep.subr.mxu0 0.0
  %74 = vmatpush1.msra.mxu0 %v38
  %75 = vmatprep.subr.mxu0 0.0
  %76 = vmatpush1.msra.mxu0 0.0
  %77 = vmatprep.subr.mxu0 0.0
  %78 = vmatpush1.msra.mxu0 0.0
  %79 = vmatprep.subr.mxu0 0.0
  %80 = vmatpush1.msra.mxu0 0.0
  %81 = vmatprep.subr.mxu0 0.0
  %82 = vmatpush1.msra.mxu0 0.0
  %83 = vmatprep.subr.mxu0 0.0
  %84 = vmatpush1.msra.mxu0 0.0
  %85 = vmatprep.subr.mxu0 0.0
  %86 = vmatpush1.msra.mxu0 0.0
  %87 = vmatprep.subr.mxu0 0.0
  %88 = vmatpush1.msra.mxu0 0.0
  %89 = vmatprep.subr.mxu0 0.0
  %90 = vmatpush1.msra.mxu0 0.0
  %91 = vmatprep.subr.mxu0 0.0
  %92 = vmatpush1.msra.mxu0 0.0
  %93 = vmatprep.subr.mxu0 0.0
  %94 = vmatpush1.msra.mxu0 0.0
  %95 = vmatprep.subr.mxu0 0.0
  %96 = vmatpush1.msra.mxu0 0.0
  %97 = vmatprep.subr.mxu0 0.0
  %98 = vmatpush1.msra.mxu0 0.0
  %99 = vmatprep.subr.mxu0 0.0
  %100 = vmatpush1.msra.mxu0 0.0
  %101 = vmatprep.subr.mxu0 0.0
  %102 = vmatpush1.msra.mxu0 0.0
  %103 = vmatprep.subr.mxu0 0.0
  %104 = vmatpush1.msra.mxu0 0.0
  %105 = vmatprep.subr.mxu0 0.0
  %106 = vmatpush1.msra.mxu0 0.0
  %107 = vmatprep.subr.mxu0 0.0
  %108 = vmatpush1.msra.mxu0 0.0
  %109 = vmatprep.subr.mxu0 0.0
  %110 = vmatpush1.msra.mxu0 0.0
  %111 = vmatprep.subr.mxu0 0.0
  %112 = vmatpush1.msra.mxu0 0.0
  %113 = vmatprep.subr.mxu0 0.0
  %114 = vmatpush1.msra.mxu0 0.0
  %115 = vmatprep.subr.mxu0 0.0
  %116 = vmatpush1.msra.mxu0 0.0
  %117 = vmatprep.subr.mxu0 0.0
  %118 = vmatpush1.msra.mxu0 0.0
  %119 = vmatprep.subr.mxu0 0.0
  %120 = vmatpush1.msra.mxu0 0.0
  %121 = vmatprep.subr.mxu0 0.0
  %122 = vmatpush1.msra.mxu0 0.0
  %123 = vmatprep.subr.mxu0 0.0
  %124 = vmatpush1.msra.mxu0 0.0
  %125 = vmatprep.subr.mxu0 0.0
  %126 = vmatpush1.msra.mxu0 0.0
  %127 = vmatprep.subr.mxu0 0.0
  %128 = vmatpush1.msra.mxu0 0.0
  %129 = vmatprep.subr.mxu0 0.0
  %130 = vmatpush1.msra.mxu0 0.0
  %131 = vmatprep.subr.mxu0 0.0
  %132 = vmatpush1.msra.mxu0 0.0
  %133 = vmatprep.subr.mxu0 0.0
  %134 = vmatpush1.msra.mxu0 0.0
  %135 = vmatprep.mubr.f32.mxu0 0.0
  %136 = vmatmul.mubr.f32.gmra.mrb[0].mxu0 %v48
  %v137 = vpop.f32.mrb[0].mxu0
  %v138 = vadd.f32 %v44, %v137
  %v139 = vpop.f32.mrb[0].mxu0
  %140 = vmatprep.mubr.f32.mxu0 0.0
  %141 = vmatmul.mubr.f32.gmra.mrb[0].mxu0 %v51
  %v142 = vpop.f32.mrb[0].mxu0
  %v143 = vadd.f32 %v44, %v142
  %v144 = vpop.f32.mrb[0].mxu0
  %145 = vmatprep.mubr.f32.mxu0 0.0
  %146 = vmatmul.mubr.f32.gmra.mrb[0].mxu0 %v54
  %v147 = vpop.f32.mrb[0].mxu0
  %v148 = vadd.f32 %v44, %v147
  %v149 = vpop.f32.mrb[0].mxu0
  %150 = vmatprep.mubr.f32.mxu0 0.0
  %151 = vmatmul.mubr.f32.gmra.mrb[0].mxu0 %v57
  %v152 = vpop.f32.mrb[0].mxu0
  %v153 = vadd.f32 %v44, %v152
  %v154 = vpop.f32.mrb[0].mxu0
  %155 = vmatprep.mubr.f32.mxu0 0.0
  %156 = vmatmul.mubr.f32.gmra.mrb[0].mxu0 %v60
  %v157 = vpop.f32.mrb[0].mxu0
  %v158 = vadd.f32 %v44, %v157
  %v159 = vpop.f32.mrb[0].mxu0
  %160 = vmatprep.mubr.f32.mxu0 0.0
  %161 = vmatmul.mubr.f32.gmra.mrb[0].mxu0 %v63
  %v162 = vpop.f32.mrb[0].mxu0
  %v163 = vadd.f32 %v44, %v162
  %v164 = vpop.f32.mrb[0].mxu0
  %165 = vmatprep.mubr.f32.mxu0 0.0
  %166 = vmatmul.mubr.f32.gmra.mrb[0].mxu0 %v66
  %v167 = vpop.f32.mrb[0].mxu0
  %v168 = vadd.f32 %v44, %v167
  %v169 = vpop.f32.mrb[0].mxu0
  %170 = vmatprep.mubr.f32.mxu0 0.0
  %171 = vmatmul.mubr.f32.gmra.mrb[0].mxu0 %v69
  %v172 = vpop.f32.mrb[0].mxu0
  %v173 = vadd.f32 %v44, %v172
  %v174 = vpop.f32.mrb[0].mxu0
  %175 = vdwg.mxu0
  %v176 = vld [vmem:[%s3] sm:$0xff]
  %v177 = vld [vmem:[%s3 + $0x8] sm:$0xff]
  %v178 = vld [vmem:[%s3 + $0x10] sm:$0xff]
  %v179 = vld [vmem:[%s3 + $0x18] sm:$0xff]
  %vm180 = vcmask 261120
  %v182 = vsel %vm180, 0.0, 0
  %184 = vmatprep.subr.mxu0 0.0
  %185 = vmatpush1.msra.mxu0 %v176
  %186 = vmatprep.subr.mxu0 0.0
  %187 = vmatpush1.msra.mxu0 %v177
  %188 = vmatprep.subr.mxu0 0.0
  %189 = vmatpush1.msra.mxu0 %v178
  %190 = vmatprep.subr.mxu0 0.0
  %191 = vmatpush1.msra.mxu0 %v179
  %192 = vmatprep.subr.mxu0 0.0
  %193 = vmatpush1.msra.mxu0 0.0
  %194 = vmatprep.subr.mxu0 0.0
  %195 = vmatpush1.msra.mxu0 0.0
  %196 = vmatprep.subr.mxu0 0.0
  %197 = vmatpush1.msra.mxu0 0.0
  %198 = vmatprep.subr.mxu0 0.0
  %199 = vmatpush1.msra.mxu0 0.0
  %200 = vmatprep.subr.mxu0 0.0
  %201 = vmatpush1.msra.mxu0 0.0
  %202 = vmatprep.subr.mxu0 0.0
  %203 = vmatpush1.msra.mxu0 0.0
  %204 = vmatprep.subr.mxu0 0.0
  %205 = vmatpush1.msra.mxu0 0.0
  %206 = vmatprep.subr.mxu0 0.0
  %207 = vmatpush1.msra.mxu0 0.0
  %208 = vmatprep.subr.mxu0 0.0
  %209 = vmatpush1.msra.mxu0 0.0
  %210 = vmatprep.subr.mxu0 0.0
  %211 = vmatpush1.msra.mxu0 0.0
  %212 = vmatprep.subr.mxu0 0.0
  %213 = vmatpush1.msra.mxu0 0.0
  %214 = vmatprep.subr.mxu0 0.0
  %215 = vmatpush1.msra.mxu0 0.0
  %216 = vmatprep.subr.mxu0 0.0
  %217 = vmatpush1.msra.mxu0 0.0
  %218 = vmatprep.subr.mxu0 0.0
  %219 = vmatpush1.msra.mxu0 0.0
  %220 = vmatprep.subr.mxu0 0.0
  %221 = vmatpush1.msra.mxu0 0.0
  %222 = vmatprep.subr.mxu0 0.0
  %223 = vmatpush1.msra.mxu0 0.0
  %224 = vmatprep.subr.mxu0 0.0
  %225 = vmatpush1.msra.mxu0 0.0
  %226 = vmatprep.subr.mxu0 0.0
  %227 = vmatpush1.msra.mxu0 0.0
  %228 = vmatprep.subr.mxu0 0.0
  %229 = vmatpush1.msra.mxu0 0.0
  %230 = vmatprep.subr.mxu0 0.0
  %231 = vmatpush1.msra.mxu0 0.0
  %232 = vmatprep.subr.mxu0 0.0
  %233 = vmatpush1.msra.mxu0 0.0
  %234 = vmatprep.subr.mxu0 0.0
  %235 = vmatpush1.msra.mxu0 0.0
  %236 = vmatprep.subr.mxu0 0.0
  %237 = vmatpush1.msra.mxu0 0.0
  %238 = vmatprep.subr.mxu0 0.0
  %239 = vmatpush1.msra.mxu0 0.0
  %240 = vmatprep.subr.mxu0 0.0
  %241 = vmatpush1.msra.mxu0 0.0
  %242 = vmatprep.subr.mxu0 0.0
  %243 = vmatpush1.msra.mxu0 0.0
  %244 = vmatprep.subr.mxu0 0.0
  %245 = vmatpush1.msra.mxu0 0.0
  %246 = vmatprep.subr.mxu0 0.0
  %247 = vmatpush1.msra.mxu0 0.0
  %248 = vmatprep.mubr.f32.mxu0 0.0
  %249 = vmatmul.mubr.f32.gmra.mrb[0].mxu0 %v182
  %v250 = vpop.f32.mrb[0].mxu0
  %v251 = vadd.f32 0.0, %v250
  %v252 = vpop.f32.mrb[0].mxu0
  %253 = vdwg.mxu0
  %v254 = vadd.f32 %v138, %v251
  %v255 = vxor.u32 %v254, 2147483648
  %v256 = vmul.f32 %v255, 1.442695
  %v257 = vpow.pop %v256
  %v258 = vadd.f32 %v257, 1.0
  %v259 = vrcp.pop %v258
  %v260 = vmul.f32 1.0, %v259
  %v261 = vtanh.pop %v254
  %v262 = vmul.f32 %v260, 0.0
  %264 = vrot.lane.b32.xlu0 %v261, 64
  %v265 = vpop.permute.xlu0 %264
  %v267 = vmul.f32 %v260, %v265
  %269 = vrot.lane.b32.xlu0 %v267, 32
  %v270 = vpop.permute.xlu0 %269
  %v272 = vadd.f32 %v262, %v270
  %v273 = vtanh.pop %v272
  %275 = vrot.lane.b32.xlu0 %v273, 64
  %v276 = vpop.permute.xlu0 %275
  %v278 = vmul.f32 %v260, %v276
  %280 = vrot.lane.b32.xlu0 %v278, 32
  %v281 = vpop.permute.xlu0 %280
  %v282 = vsel %vm180, %v281, 0
  %284 = vmatprep.subr.mxu0 0.0
  %285 = vmatpush1.msra.mxu0 %v176
  %286 = vmatprep.subr.mxu0 0.0
  %287 = vmatpush1.msra.mxu0 %v177
  %288 = vmatprep.subr.mxu0 0.0
  %289 = vmatpush1.msra.mxu0 %v178
  %290 = vmatprep.subr.mxu0 0.0
  %291 = vmatpush1.msra.mxu0 %v179
  %292 = vmatprep.subr.mxu0 0.0
  %293 = vmatpush1.msra.mxu0 0.0
  %294 = vmatprep.subr.mxu0 0.0
  %295 = vmatpush1.msra.mxu0 0.0
  %296 = vmatprep.subr.mxu0 0.0
  %297 = vmatpush1.msra.mxu0 0.0
  %298 = vmatprep.subr.mxu0 0.0
  %299 = vmatpush1.msra.mxu0 0.0
  %300 = vmatprep.subr.mxu0 0.0
  %301 = vmatpush1.msra.mxu0 0.0
  %302 = vmatprep.subr.mxu0 0.0
  %303 = vmatpush1.msra.mxu0 0.0
  %304 = vmatprep.subr.mxu0 0.0
  %305 = vmatpush1.msra.mxu0 0.0
  %306 = vmatprep.subr.mxu0 0.0
  %307 = vmatpush1.msra.mxu0 0.0
  %308 = vmatprep.subr.mxu0 0.0
  %309 = vmatpush1.msra.mxu0 0.0
  %310 = vmatprep.subr.mxu0 0.0
  %311 = vmatpush1.msra.mxu0 0.0
  %312 = vmatprep.subr.mxu0 0.0
  %313 = vmatpush1.msra.mxu0 0.0
  %314 = vmatprep.subr.mxu0 0.0
  %315 = vmatpush1.msra.mxu0 0.0
  %316 = vmatprep.subr.mxu0 0.0
  %317 = vmatpush1.msra.mxu0 0.0
  %318 = vmatprep.subr.mxu0 0.0
  %319 = vmatpush1.msra.mxu0 0.0
  %320 = vmatprep.subr.mxu0 0.0
  %321 = vmatpush1.msra.mxu0 0.0
  %322 = vmatprep.subr.mxu0 0.0
  %323 = vmatpush1.msra.mxu0 0.0
  %324 = vmatprep.subr.mxu0 0.0
  %325 = vmatpush1.msra.mxu0 0.0
  %326 = vmatprep.subr.mxu0 0.0
  %327 = vmatpush1.msra.mxu0 0.0
  %328 = vmatprep.subr.mxu0 0.0
  %329 = vmatpush1.msra.mxu0 0.0
  %330 = vmatprep.subr.mxu0 0.0
  %331 = vmatpush1.msra.mxu0 0.0
  %332 = vmatprep.subr.mxu0 0.0
  %333 = vmatpush1.msra.mxu0 0.0
  %334 = vmatprep.subr.mxu0 0.0
  %335 = vmatpush1.msra.mxu0 0.0
  %336 = vmatprep.subr.mxu0 0.0
  %337 = vmatpush1.msra.mxu0 0.0
  %338 = vmatprep.subr.mxu0 0.0
  %339 = vmatpush1.msra.mxu0 0.0
  %340 = vmatprep.subr.mxu0 0.0
  %341 = vmatpush1.msra.mxu0 0.0
  %342 = vmatprep.subr.mxu0 0.0
  %343 = vmatpush1.msra.mxu0 0.0
  %344 = vmatprep.subr.mxu0 0.0
  %345 = vmatpush1.msra.mxu0 0.0
  %346 = vmatprep.subr.mxu0 0.0
  %347 = vmatpush1.msra.mxu0 0.0
  %348 = vmatprep.mubr.f32.mxu0 0.0
  %349 = vmatmul.mubr.f32.gmra.mrb[0].mxu0 %v282
  %v350 = vpop.f32.mrb[0].mxu0
  %v351 = vadd.f32 0.0, %v350
  %v352 = vpop.f32.mrb[0].mxu0
  %353 = vdwg.mxu0
  %v354 = vadd.f32 %v143, %v351
  %v355 = vxor.u32 %v354, 2147483648
  %v356 = vmul.f32 %v355, 1.442695
  %v357 = vpow.pop %v356
  %v358 = vadd.f32 %v357, 1.0
  %v359 = vrcp.pop %v358
  %v360 = vmul.f32 1.0, %v359
  %v361 = vtanh.pop %v354
  %v362 = vmul.f32 %v360, %v272
  %364 = vrot.lane.b32.xlu0 %v361, 64
  %v365 = vpop.permute.xlu0 %364
  %v367 = vmul.f32 %v360, %v365
  %369 = vrot.lane.b32.xlu0 %v367, 32
  %v370 = vpop.permute.xlu0 %369
  %v372 = vadd.f32 %v362, %v370
  %v373 = vtanh.pop %v372
  %375 = vrot.lane.b32.xlu0 %v373, 64
  %v376 = vpop.permute.xlu0 %375
  %v378 = vmul.f32 %v360, %v376
  %380 = vrot.lane.b32.xlu0 %v378, 32
  %v381 = vpop.permute.xlu0 %380
  %v382 = vsel %vm180, %v381, 0
  %384 = vmatprep.subr.mxu0 0.0
  %385 = vmatpush1.msra.mxu0 %v176
  %386 = vmatprep.subr.mxu0 0.0
  %387 = vmatpush1.msra.mxu0 %v177
  %388 = vmatprep.subr.mxu0 0.0
  %389 = vmatpush1.msra.mxu0 %v178
  %390 = vmatprep.subr.mxu0 0.0
  %391 = vmatpush1.msra.mxu0 %v179
  %392 = vmatprep.subr.mxu0 0.0
  %393 = vmatpush1.msra.mxu0 0.0
  %394 = vmatprep.subr.mxu0 0.0
  %395 = vmatpush1.msra.mxu0 0.0
  %396 = vmatprep.subr.mxu0 0.0
  %397 = vmatpush1.msra.mxu0 0.0
  %398 = vmatprep.subr.mxu0 0.0
  %399 = vmatpush1.msra.mxu0 0.0
  %400 = vmatprep.subr.mxu0 0.0
  %401 = vmatpush1.msra.mxu0 0.0
  %402 = vmatprep.subr.mxu0 0.0
  %403 = vmatpush1.msra.mxu0 0.0
  %404 = vmatprep.subr.mxu0 0.0
  %405 = vmatpush1.msra.mxu0 0.0
  %406 = vmatprep.subr.mxu0 0.0
  %407 = vmatpush1.msra.mxu0 0.0
  %408 = vmatprep.subr.mxu0 0.0
  %409 = vmatpush1.msra.mxu0 0.0
  %410 = vmatprep.subr.mxu0 0.0
  %411 = vmatpush1.msra.mxu0 0.0
  %412 = vmatprep.subr.mxu0 0.0
  %413 = vmatpush1.msra.mxu0 0.0
  %414 = vmatprep.subr.mxu0 0.0
  %415 = vmatpush1.msra.mxu0 0.0
  %416 = vmatprep.subr.mxu0 0.0
  %417 = vmatpush1.msra.mxu0 0.0
  %418 = vmatprep.subr.mxu0 0.0
  %419 = vmatpush1.msra.mxu0 0.0
  %420 = vmatprep.subr.mxu0 0.0
  %421 = vmatpush1.msra.mxu0 0.0
  %422 = vmatprep.subr.mxu0 0.0
  %423 = vmatpush1.msra.mxu0 0.0
  %424 = vmatprep.subr.mxu0 0.0
  %425 = vmatpush1.msra.mxu0 0.0
  %426 = vmatprep.subr.mxu0 0.0
  %427 = vmatpush1.msra.mxu0 0.0
  %428 = vmatprep.subr.mxu0 0.0
  %429 = vmatpush1.msra.mxu0 0.0
  %430 = vmatprep.subr.mxu0 0.0
  %431 = vmatpush1.msra.mxu0 0.0
  %432 = vmatprep.subr.mxu0 0.0
  %433 = vmatpush1.msra.mxu0 0.0
  %434 = vmatprep.subr.mxu0 0.0
  %435 = vmatpush1.msra.mxu0 0.0
  %436 = vmatprep.subr.mxu0 0.0
  %437 = vmatpush1.msra.mxu0 0.0
  %438 = vmatprep.subr.mxu0 0.0
  %439 = vmatpush1.msra.mxu0 0.0
  %440 = vmatprep.subr.mxu0 0.0
  %441 = vmatpush1.msra.mxu0 0.0
  %442 = vmatprep.subr.mxu0 0.0
  %443 = vmatpush1.msra.mxu0 0.0
  %444 = vmatprep.subr.mxu0 0.0
  %445 = vmatpush1.msra.mxu0 0.0
  %446 = vmatprep.subr.mxu0 0.0
  %447 = vmatpush1.msra.mxu0 0.0
  %448 = vmatprep.mubr.f32.mxu0 0.0
  %449 = vmatmul.mubr.f32.gmra.mrb[0].mxu0 %v382
  %v450 = vpop.f32.mrb[0].mxu0
  %v451 = vadd.f32 0.0, %v450
  %v452 = vpop.f32.mrb[0].mxu0
  %453 = vdwg.mxu0
  %v454 = vadd.f32 %v148, %v451
  %v455 = vxor.u32 %v454, 2147483648
  %v456 = vmul.f32 %v455, 1.442695
  %v457 = vpow.pop %v456
  %v458 = vadd.f32 %v457, 1.0
  %v459 = vrcp.pop %v458
  %v460 = vmul.f32 1.0, %v459
  %v461 = vtanh.pop %v454
  %v462 = vmul.f32 %v460, %v372
  %464 = vrot.lane.b32.xlu0 %v461, 64
  %v465 = vpop.permute.xlu0 %464
  %v467 = vmul.f32 %v460, %v465
  %469 = vrot.lane.b32.xlu0 %v467, 32
  %v470 = vpop.permute.xlu0 %469
  %v472 = vadd.f32 %v462, %v470
  %v473 = vtanh.pop %v472
  %475 = vrot.lane.b32.xlu0 %v473, 64
  %v476 = vpop.permute.xlu0 %475
  %v478 = vmul.f32 %v460, %v476
  %480 = vrot.lane.b32.xlu0 %v478, 32
  %v481 = vpop.permute.xlu0 %480
  %v482 = vsel %vm180, %v481, 0
  %484 = vmatprep.subr.mxu0 0.0
  %485 = vmatpush1.msra.mxu0 %v176
  %486 = vmatprep.subr.mxu0 0.0
  %487 = vmatpush1.msra.mxu0 %v177
  %488 = vmatprep.subr.mxu0 0.0
  %489 = vmatpush1.msra.mxu0 %v178
  %490 = vmatprep.subr.mxu0 0.0
  %491 = vmatpush1.msra.mxu0 %v179
  %492 = vmatprep.subr.mxu0 0.0
  %493 = vmatpush1.msra.mxu0 0.0
  %494 = vmatprep.subr.mxu0 0.0
  %495 = vmatpush1.msra.mxu0 0.0
  %496 = vmatprep.subr.mxu0 0.0
  %497 = vmatpush1.msra.mxu0 0.0
  %498 = vmatprep.subr.mxu0 0.0
  %499 = vmatpush1.msra.mxu0 0.0
  %500 = vmatprep.subr.mxu0 0.0
  %501 = vmatpush1.msra.mxu0 0.0
  %502 = vmatprep.subr.mxu0 0.0
  %503 = vmatpush1.msra.mxu0 0.0
  %504 = vmatprep.subr.mxu0 0.0
  %505 = vmatpush1.msra.mxu0 0.0
  %506 = vmatprep.subr.mxu0 0.0
  %507 = vmatpush1.msra.mxu0 0.0
  %508 = vmatprep.subr.mxu0 0.0
  %509 = vmatpush1.msra.mxu0 0.0
  %510 = vmatprep.subr.mxu0 0.0
  %511 = vmatpush1.msra.mxu0 0.0
  %512 = vmatprep.subr.mxu0 0.0
  %513 = vmatpush1.msra.mxu0 0.0
  %514 = vmatprep.subr.mxu0 0.0
  %515 = vmatpush1.msra.mxu0 0.0
  %516 = vmatprep.subr.mxu0 0.0
  %517 = vmatpush1.msra.mxu0 0.0
  %518 = vmatprep.subr.mxu0 0.0
  %519 = vmatpush1.msra.mxu0 0.0
  %520 = vmatprep.subr.mxu0 0.0
  %521 = vmatpush1.msra.mxu0 0.0
  %522 = vmatprep.subr.mxu0 0.0
  %523 = vmatpush1.msra.mxu0 0.0
  %524 = vmatprep.subr.mxu0 0.0
  %525 = vmatpush1.msra.mxu0 0.0
  %526 = vmatprep.subr.mxu0 0.0
  %527 = vmatpush1.msra.mxu0 0.0
  %528 = vmatprep.subr.mxu0 0.0
  %529 = vmatpush1.msra.mxu0 0.0
  %530 = vmatprep.subr.mxu0 0.0
  %531 = vmatpush1.msra.mxu0 0.0
  %532 = vmatprep.subr.mxu0 0.0
  %533 = vmatpush1.msra.mxu0 0.0
  %534 = vmatprep.subr.mxu0 0.0
  %535 = vmatpush1.msra.mxu0 0.0
  %536 = vmatprep.subr.mxu0 0.0
  %537 = vmatpush1.msra.mxu0 0.0
  %538 = vmatprep.subr.mxu0 0.0
  %539 = vmatpush1.msra.mxu0 0.0
  %540 = vmatprep.subr.mxu0 0.0
  %541 = vmatpush1.msra.mxu0 0.0
  %542 = vmatprep.subr.mxu0 0.0
  %543 = vmatpush1.msra.mxu0 0.0
  %544 = vmatprep.subr.mxu0 0.0
  %545 = vmatpush1.msra.mxu0 0.0
  %546 = vmatprep.subr.mxu0 0.0
  %547 = vmatpush1.msra.mxu0 0.0
  %548 = vmatprep.mubr.f32.mxu0 0.0
  %549 = vmatmul.mubr.f32.gmra.mrb[0].mxu0 %v482
  %v550 = vpop.f32.mrb[0].mxu0
  %v551 = vadd.f32 0.0, %v550
  %v552 = vpop.f32.mrb[0].mxu0
  %553 = vdwg.mxu0
  %v554 = vadd.f32 %v153, %v551
  %v555 = vxor.u32 %v554, 2147483648
  %v556 = vmul.f32 %v555, 1.442695
  %v557 = vpow.pop %v556
  %v558 = vadd.f32 %v557, 1.0
  %v559 = vrcp.pop %v558
  %v560 = vmul.f32 1.0, %v559
  %v561 = vtanh.pop %v554
  %v562 = vmul.f32 %v560, %v472
  %564 = vrot.lane.b32.xlu0 %v561, 64
  %v565 = vpop.permute.xlu0 %564
  %v567 = vmul.f32 %v560, %v565
  %569 = vrot.lane.b32.xlu0 %v567, 32
  %v570 = vpop.permute.xlu0 %569
  %v572 = vadd.f32 %v562, %v570
  %v573 = vtanh.pop %v572
  %575 = vrot.lane.b32.xlu0 %v573, 64
  %v576 = vpop.permute.xlu0 %575
  %v578 = vmul.f32 %v560, %v576
  %580 = vrot.lane.b32.xlu0 %v578, 32
  %v581 = vpop.permute.xlu0 %580
  %v582 = vsel %vm180, %v581, 0
  %584 = vmatprep.subr.mxu0 0.0
  %585 = vmatpush1.msra.mxu0 %v176
  %586 = vmatprep.subr.mxu0 0.0
  %587 = vmatpush1.msra.mxu0 %v177
  %588 = vmatprep.subr.mxu0 0.0
  %589 = vmatpush1.msra.mxu0 %v178
  %590 = vmatprep.subr.mxu0 0.0
  %591 = vmatpush1.msra.mxu0 %v179
  %592 = vmatprep.subr.mxu0 0.0
  %593 = vmatpush1.msra.mxu0 0.0
  %594 = vmatprep.subr.mxu0 0.0
  %595 = vmatpush1.msra.mxu0 0.0
  %596 = vmatprep.subr.mxu0 0.0
  %597 = vmatpush1.msra.mxu0 0.0
  %598 = vmatprep.subr.mxu0 0.0
  %599 = vmatpush1.msra.mxu0 0.0
  %600 = vmatprep.subr.mxu0 0.0
  %601 = vmatpush1.msra.mxu0 0.0
  %602 = vmatprep.subr.mxu0 0.0
  %603 = vmatpush1.msra.mxu0 0.0
  %604 = vmatprep.subr.mxu0 0.0
  %605 = vmatpush1.msra.mxu0 0.0
  %606 = vmatprep.subr.mxu0 0.0
  %607 = vmatpush1.msra.mxu0 0.0
  %608 = vmatprep.subr.mxu0 0.0
  %609 = vmatpush1.msra.mxu0 0.0
  %610 = vmatprep.subr.mxu0 0.0
  %611 = vmatpush1.msra.mxu0 0.0
  %612 = vmatprep.subr.mxu0 0.0
  %613 = vmatpush1.msra.mxu0 0.0
  %614 = vmatprep.subr.mxu0 0.0
  %615 = vmatpush1.msra.mxu0 0.0
  %616 = vmatprep.subr.mxu0 0.0
  %617 = vmatpush1.msra.mxu0 0.0
  %618 = vmatprep.subr.mxu0 0.0
  %619 = vmatpush1.msra.mxu0 0.0
  %620 = vmatprep.subr.mxu0 0.0
  %621 = vmatpush1.msra.mxu0 0.0
  %622 = vmatprep.subr.mxu0 0.0
  %623 = vmatpush1.msra.mxu0 0.0
  %624 = vmatprep.subr.mxu0 0.0
  %625 = vmatpush1.msra.mxu0 0.0
  %626 = vmatprep.subr.mxu0 0.0
  %627 = vmatpush1.msra.mxu0 0.0
  %628 = vmatprep.subr.mxu0 0.0
  %629 = vmatpush1.msra.mxu0 0.0
  %630 = vmatprep.subr.mxu0 0.0
  %631 = vmatpush1.msra.mxu0 0.0
  %632 = vmatprep.subr.mxu0 0.0
  %633 = vmatpush1.msra.mxu0 0.0
  %634 = vmatprep.subr.mxu0 0.0
  %635 = vmatpush1.msra.mxu0 0.0
  %636 = vmatprep.subr.mxu0 0.0
  %637 = vmatpush1.msra.mxu0 0.0
  %638 = vmatprep.subr.mxu0 0.0
  %639 = vmatpush1.msra.mxu0 0.0
  %640 = vmatprep.subr.mxu0 0.0
  %641 = vmatpush1.msra.mxu0 0.0
  %642 = vmatprep.subr.mxu0 0.0
  %643 = vmatpush1.msra.mxu0 0.0
  %644 = vmatprep.subr.mxu0 0.0
  %645 = vmatpush1.msra.mxu0 0.0
  %646 = vmatprep.subr.mxu0 0.0
  %647 = vmatpush1.msra.mxu0 0.0
  %648 = vmatprep.mubr.f32.mxu0 0.0
  %649 = vmatmul.mubr.f32.gmra.mrb[0].mxu0 %v582
  %v650 = vpop.f32.mrb[0].mxu0
  %v651 = vadd.f32 0.0, %v650
  %v652 = vpop.f32.mrb[0].mxu0
  %653 = vdwg.mxu0
  %v654 = vadd.f32 %v158, %v651
  %v655 = vxor.u32 %v654, 2147483648
  %v656 = vmul.f32 %v655, 1.442695
  %v657 = vpow.pop %v656
  %v658 = vadd.f32 %v657, 1.0
  %v659 = vrcp.pop %v658
  %v660 = vmul.f32 1.0, %v659
  %v661 = vtanh.pop %v654
  %v662 = vmul.f32 %v660, %v572
  %664 = vrot.lane.b32.xlu0 %v661, 64
  %v665 = vpop.permute.xlu0 %664
  %v667 = vmul.f32 %v660, %v665
  %669 = vrot.lane.b32.xlu0 %v667, 32
  %v670 = vpop.permute.xlu0 %669
  %v672 = vadd.f32 %v662, %v670
  %v673 = vtanh.pop %v672
  %675 = vrot.lane.b32.xlu0 %v673, 64
  %v676 = vpop.permute.xlu0 %675
  %v678 = vmul.f32 %v660, %v676
  %680 = vrot.lane.b32.xlu0 %v678, 32
  %v681 = vpop.permute.xlu0 %680
  %v682 = vsel %vm180, %v681, 0
  %684 = vmatprep.subr.mxu0 0.0
  %685 = vmatpush1.msra.mxu0 %v176
  %686 = vmatprep.subr.mxu0 0.0
  %687 = vmatpush1.msra.mxu0 %v177
  %688 = vmatprep.subr.mxu0 0.0
  %689 = vmatpush1.msra.mxu0 %v178
  %690 = vmatprep.subr.mxu0 0.0
  %691 = vmatpush1.msra.mxu0 %v179
  %692 = vmatprep.subr.mxu0 0.0
  %693 = vmatpush1.msra.mxu0 0.0
  %694 = vmatprep.subr.mxu0 0.0
  %695 = vmatpush1.msra.mxu0 0.0
  %696 = vmatprep.subr.mxu0 0.0
  %697 = vmatpush1.msra.mxu0 0.0
  %698 = vmatprep.subr.mxu0 0.0
  %699 = vmatpush1.msra.mxu0 0.0
  %700 = vmatprep.subr.mxu0 0.0
  %701 = vmatpush1.msra.mxu0 0.0
  %702 = vmatprep.subr.mxu0 0.0
  %703 = vmatpush1.msra.mxu0 0.0
  %704 = vmatprep.subr.mxu0 0.0
  %705 = vmatpush1.msra.mxu0 0.0
  %706 = vmatprep.subr.mxu0 0.0
  %707 = vmatpush1.msra.mxu0 0.0
  %708 = vmatprep.subr.mxu0 0.0
  %709 = vmatpush1.msra.mxu0 0.0
  %710 = vmatprep.subr.mxu0 0.0
  %711 = vmatpush1.msra.mxu0 0.0
  %712 = vmatprep.subr.mxu0 0.0
  %713 = vmatpush1.msra.mxu0 0.0
  %714 = vmatprep.subr.mxu0 0.0
  %715 = vmatpush1.msra.mxu0 0.0
  %716 = vmatprep.subr.mxu0 0.0
  %717 = vmatpush1.msra.mxu0 0.0
  %718 = vmatprep.subr.mxu0 0.0
  %719 = vmatpush1.msra.mxu0 0.0
  %720 = vmatprep.subr.mxu0 0.0
  %721 = vmatpush1.msra.mxu0 0.0
  %722 = vmatprep.subr.mxu0 0.0
  %723 = vmatpush1.msra.mxu0 0.0
  %724 = vmatprep.subr.mxu0 0.0
  %725 = vmatpush1.msra.mxu0 0.0
  %726 = vmatprep.subr.mxu0 0.0
  %727 = vmatpush1.msra.mxu0 0.0
  %728 = vmatprep.subr.mxu0 0.0
  %729 = vmatpush1.msra.mxu0 0.0
  %730 = vmatprep.subr.mxu0 0.0
  %731 = vmatpush1.msra.mxu0 0.0
  %732 = vmatprep.subr.mxu0 0.0
  %733 = vmatpush1.msra.mxu0 0.0
  %734 = vmatprep.subr.mxu0 0.0
  %735 = vmatpush1.msra.mxu0 0.0
  %736 = vmatprep.subr.mxu0 0.0
  %737 = vmatpush1.msra.mxu0 0.0
  %738 = vmatprep.subr.mxu0 0.0
  %739 = vmatpush1.msra.mxu0 0.0
  %740 = vmatprep.subr.mxu0 0.0
  %741 = vmatpush1.msra.mxu0 0.0
  %742 = vmatprep.subr.mxu0 0.0
  %743 = vmatpush1.msra.mxu0 0.0
  %744 = vmatprep.subr.mxu0 0.0
  %745 = vmatpush1.msra.mxu0 0.0
  %746 = vmatprep.subr.mxu0 0.0
  %747 = vmatpush1.msra.mxu0 0.0
  %748 = vmatprep.mubr.f32.mxu0 0.0
  %749 = vmatmul.mubr.f32.gmra.mrb[0].mxu0 %v682
  %v750 = vpop.f32.mrb[0].mxu0
  %v751 = vadd.f32 0.0, %v750
  %v752 = vpop.f32.mrb[0].mxu0
  %753 = vdwg.mxu0
  %v754 = vadd.f32 %v163, %v751
  %v755 = vxor.u32 %v754, 2147483648
  %v756 = vmul.f32 %v755, 1.442695
  %v757 = vpow.pop %v756
  %v758 = vadd.f32 %v757, 1.0
  %v759 = vrcp.pop %v758
  %v760 = vmul.f32 1.0, %v759
  %v761 = vtanh.pop %v754
  %v762 = vmul.f32 %v760, %v672
  %764 = vrot.lane.b32.xlu0 %v761, 64
  %v765 = vpop.permute.xlu0 %764
  %v767 = vmul.f32 %v760, %v765
  %769 = vrot.lane.b32.xlu0 %v767, 32
  %v770 = vpop.permute.xlu0 %769
  %v772 = vadd.f32 %v762, %v770
  %v773 = vtanh.pop %v772
  %775 = vrot.lane.b32.xlu0 %v773, 64
  %v776 = vpop.permute.xlu0 %775
  %v778 = vmul.f32 %v760, %v776
  %780 = vrot.lane.b32.xlu0 %v778, 32
  %v781 = vpop.permute.xlu0 %780
  %v782 = vsel %vm180, %v781, 0
  %784 = vmatprep.subr.mxu0 0.0
  %785 = vmatpush1.msra.mxu0 %v176
  %786 = vmatprep.subr.mxu0 0.0
  %787 = vmatpush1.msra.mxu0 %v177
  %788 = vmatprep.subr.mxu0 0.0
  %789 = vmatpush1.msra.mxu0 %v178
  %790 = vmatprep.subr.mxu0 0.0
  %791 = vmatpush1.msra.mxu0 %v179
  %792 = vmatprep.subr.mxu0 0.0
  %793 = vmatpush1.msra.mxu0 0.0
  %794 = vmatprep.subr.mxu0 0.0
  %795 = vmatpush1.msra.mxu0 0.0
  %796 = vmatprep.subr.mxu0 0.0
  %797 = vmatpush1.msra.mxu0 0.0
  %798 = vmatprep.subr.mxu0 0.0
  %799 = vmatpush1.msra.mxu0 0.0
  %800 = vmatprep.subr.mxu0 0.0
  %801 = vmatpush1.msra.mxu0 0.0
  %802 = vmatprep.subr.mxu0 0.0
  %803 = vmatpush1.msra.mxu0 0.0
  %804 = vmatprep.subr.mxu0 0.0
  %805 = vmatpush1.msra.mxu0 0.0
  %806 = vmatprep.subr.mxu0 0.0
  %807 = vmatpush1.msra.mxu0 0.0
  %808 = vmatprep.subr.mxu0 0.0
  %809 = vmatpush1.msra.mxu0 0.0
  %810 = vmatprep.subr.mxu0 0.0
  %811 = vmatpush1.msra.mxu0 0.0
  %812 = vmatprep.subr.mxu0 0.0
  %813 = vmatpush1.msra.mxu0 0.0
  %814 = vmatprep.subr.mxu0 0.0
  %815 = vmatpush1.msra.mxu0 0.0
  %816 = vmatprep.subr.mxu0 0.0
  %817 = vmatpush1.msra.mxu0 0.0
  %818 = vmatprep.subr.mxu0 0.0
  %819 = vmatpush1.msra.mxu0 0.0
  %820 = vmatprep.subr.mxu0 0.0
  %821 = vmatpush1.msra.mxu0 0.0
  %822 = vmatprep.subr.mxu0 0.0
  %823 = vmatpush1.msra.mxu0 0.0
  %824 = vmatprep.subr.mxu0 0.0
  %825 = vmatpush1.msra.mxu0 0.0
  %826 = vmatprep.subr.mxu0 0.0
  %827 = vmatpush1.msra.mxu0 0.0
  %828 = vmatprep.subr.mxu0 0.0
  %829 = vmatpush1.msra.mxu0 0.0
  %830 = vmatprep.subr.mxu0 0.0
  %831 = vmatpush1.msra.mxu0 0.0
  %832 = vmatprep.subr.mxu0 0.0
  %833 = vmatpush1.msra.mxu0 0.0
  %834 = vmatprep.subr.mxu0 0.0
  %835 = vmatpush1.msra.mxu0 0.0
  %836 = vmatprep.subr.mxu0 0.0
  %837 = vmatpush1.msra.mxu0 0.0
  %838 = vmatprep.subr.mxu0 0.0
  %839 = vmatpush1.msra.mxu0 0.0
  %840 = vmatprep.subr.mxu0 0.0
  %841 = vmatpush1.msra.mxu0 0.0
  %842 = vmatprep.subr.mxu0 0.0
  %843 = vmatpush1.msra.mxu0 0.0
  %844 = vmatprep.subr.mxu0 0.0
  %845 = vmatpush1.msra.mxu0 0.0
  %846 = vmatprep.subr.mxu0 0.0
  %847 = vmatpush1.msra.mxu0 0.0
  %848 = vmatprep.mubr.f32.mxu0 0.0
  %849 = vmatmul.mubr.f32.gmra.mrb[0].mxu0 %v782
  %v850 = vpop.f32.mrb[0].mxu0
  %v851 = vadd.f32 0.0, %v850
  %v852 = vpop.f32.mrb[0].mxu0
  %853 = vdwg.mxu0
  %v854 = vadd.f32 %v168, %v851
  %v855 = vxor.u32 %v854, 2147483648
  %v856 = vmul.f32 %v855, 1.442695
  %v857 = vpow.pop %v856
  %v858 = vadd.f32 %v857, 1.0
  %v859 = vrcp.pop %v858
  %v860 = vmul.f32 1.0, %v859
  %v861 = vtanh.pop %v854
  %v862 = vmul.f32 %v860, %v772
  %864 = vrot.lane.b32.xlu0 %v861, 64
  %v865 = vpop.permute.xlu0 %864
  %v867 = vmul.f32 %v860, %v865
  %869 = vrot.lane.b32.xlu0 %v867, 32
  %v870 = vpop.permute.xlu0 %869
  %v872 = vadd.f32 %v862, %v870
  %v873 = vtanh.pop %v872
  %875 = vrot.lane.b32.xlu0 %v873, 64
  %v876 = vpop.permute.xlu0 %875
  %v878 = vmul.f32 %v860, %v876
  %880 = vrot.lane.b32.xlu0 %v878, 32
  %v881 = vpop.permute.xlu0 %880
  %v882 = vsel %vm180, %v881, 0
  %884 = vmatprep.subr.mxu0 0.0
  %885 = vmatpush1.msra.mxu0 %v176
  %886 = vmatprep.subr.mxu0 0.0
  %887 = vmatpush1.msra.mxu0 %v177
  %888 = vmatprep.subr.mxu0 0.0
  %889 = vmatpush1.msra.mxu0 %v178
  %890 = vmatprep.subr.mxu0 0.0
  %891 = vmatpush1.msra.mxu0 %v179
  %892 = vmatprep.subr.mxu0 0.0
  %893 = vmatpush1.msra.mxu0 0.0
  %894 = vmatprep.subr.mxu0 0.0
  %895 = vmatpush1.msra.mxu0 0.0
  %896 = vmatprep.subr.mxu0 0.0
  %897 = vmatpush1.msra.mxu0 0.0
  %898 = vmatprep.subr.mxu0 0.0
  %899 = vmatpush1.msra.mxu0 0.0
  %900 = vmatprep.subr.mxu0 0.0
  %901 = vmatpush1.msra.mxu0 0.0
  %902 = vmatprep.subr.mxu0 0.0
  %903 = vmatpush1.msra.mxu0 0.0
  %904 = vmatprep.subr.mxu0 0.0
  %905 = vmatpush1.msra.mxu0 0.0
  %906 = vmatprep.subr.mxu0 0.0
  %907 = vmatpush1.msra.mxu0 0.0
  %908 = vmatprep.subr.mxu0 0.0
  %909 = vmatpush1.msra.mxu0 0.0
  %910 = vmatprep.subr.mxu0 0.0
  %911 = vmatpush1.msra.mxu0 0.0
  %912 = vmatprep.subr.mxu0 0.0
  %913 = vmatpush1.msra.mxu0 0.0
  %914 = vmatprep.subr.mxu0 0.0
  %915 = vmatpush1.msra.mxu0 0.0
  %916 = vmatprep.subr.mxu0 0.0
  %917 = vmatpush1.msra.mxu0 0.0
  %918 = vmatprep.subr.mxu0 0.0
  %919 = vmatpush1.msra.mxu0 0.0
  %920 = vmatprep.subr.mxu0 0.0
  %921 = vmatpush1.msra.mxu0 0.0
  %922 = vmatprep.subr.mxu0 0.0
  %923 = vmatpush1.msra.mxu0 0.0
  %924 = vmatprep.subr.mxu0 0.0
  %925 = vmatpush1.msra.mxu0 0.0
  %926 = vmatprep.subr.mxu0 0.0
  %927 = vmatpush1.msra.mxu0 0.0
  %928 = vmatprep.subr.mxu0 0.0
  %929 = vmatpush1.msra.mxu0 0.0
  %930 = vmatprep.subr.mxu0 0.0
  %931 = vmatpush1.msra.mxu0 0.0
  %932 = vmatprep.subr.mxu0 0.0
  %933 = vmatpush1.msra.mxu0 0.0
  %934 = vmatprep.subr.mxu0 0.0
  %935 = vmatpush1.msra.mxu0 0.0
  %936 = vmatprep.subr.mxu0 0.0
  %937 = vmatpush1.msra.mxu0 0.0
  %938 = vmatprep.subr.mxu0 0.0
  %939 = vmatpush1.msra.mxu0 0.0
  %940 = vmatprep.subr.mxu0 0.0
  %941 = vmatpush1.msra.mxu0 0.0
  %942 = vmatprep.subr.mxu0 0.0
  %943 = vmatpush1.msra.mxu0 0.0
  %944 = vmatprep.subr.mxu0 0.0
  %945 = vmatpush1.msra.mxu0 0.0
  %946 = vmatprep.subr.mxu0 0.0
  %947 = vmatpush1.msra.mxu0 0.0
  %948 = vmatprep.mubr.f32.mxu0 0.0
  %949 = vmatmul.mubr.f32.gmra.mrb[0].mxu0 %v882
  %v950 = vpop.f32.mrb[0].mxu0
  %v951 = vadd.f32 0.0, %v950
  %v952 = vpop.f32.mrb[0].mxu0
  %953 = vdwg.mxu0
  %v954 = vadd.f32 %v173, %v951
  %v955 = vxor.u32 %v954, 2147483648
  %v956 = vmul.f32 %v955, 1.442695
  %v957 = vpow.pop %v956
  %v958 = vadd.f32 %v957, 1.0
  %v959 = vrcp.pop %v958
  %v960 = vmul.f32 1.0, %v959
  %v961 = vtanh.pop %v954
  %v962 = vmul.f32 %v960, %v872
  %964 = vrot.lane.b32.xlu0 %v961, 64
  %v965 = vpop.permute.xlu0 %964
  %v967 = vmul.f32 %v960, %v965
  %969 = vrot.lane.b32.xlu0 %v967, 32
  %v970 = vpop.permute.xlu0 %969
  %v972 = vadd.f32 %v962, %v970
  %v973 = vtanh.pop %v972
  %975 = vrot.lane.b32.xlu0 %v973, 64
  %v976 = vpop.permute.xlu0 %975
  %v978 = vmul.f32 %v960, %v976
  %v979 = vld [vmem:[%s4] sm:$0xff]
  %v980 = vld [vmem:[%s4 + $0x8] sm:$0xff]
  %v981 = vld [vmem:[%s4 + $0x10] sm:$0xff]
  %v982 = vld [vmem:[%s4 + $0x18] sm:$0xff]
  %v983 = vld [vmem:[%s5] sm:$0x1]
  %v985 = vlaneseq
  %v986 = vshrl.u32 %v985, 7
  %v987 = vsub.s32 0, %v986
  %v988 = vrot.slane %v983, %v987
  %991 = vrot.lane.b32.xlu0 %v978, 32
  %v992 = vpop.permute.xlu0 %991
  %v993 = vsel %vm180, %v992, 0
  %995 = vmatprep.subr.mxu0 0.0
  %996 = vmatpush1.msra.mxu0 %v979
  %997 = vmatprep.subr.mxu0 0.0
  %998 = vmatpush1.msra.mxu0 %v980
  %999 = vmatprep.subr.mxu0 0.0
  %1000 = vmatpush1.msra.mxu0 %v981
  %1001 = vmatprep.subr.mxu0 0.0
  %1002 = vmatpush1.msra.mxu0 %v982
  %1003 = vmatprep.subr.mxu0 0.0
  %1004 = vmatpush1.msra.mxu0 0.0
  %1005 = vmatprep.subr.mxu0 0.0
  %1006 = vmatpush1.msra.mxu0 0.0
  %1007 = vmatprep.subr.mxu0 0.0
  %1008 = vmatpush1.msra.mxu0 0.0
  %1009 = vmatprep.subr.mxu0 0.0
  %1010 = vmatpush1.msra.mxu0 0.0
  %1011 = vmatprep.subr.mxu0 0.0
  %1012 = vmatpush1.msra.mxu0 0.0
  %1013 = vmatprep.subr.mxu0 0.0
  %1014 = vmatpush1.msra.mxu0 0.0
  %1015 = vmatprep.subr.mxu0 0.0
  %1016 = vmatpush1.msra.mxu0 0.0
  %1017 = vmatprep.subr.mxu0 0.0
  %1018 = vmatpush1.msra.mxu0 0.0
  %1019 = vmatprep.subr.mxu0 0.0
  %1020 = vmatpush1.msra.mxu0 0.0
  %1021 = vmatprep.subr.mxu0 0.0
  %1022 = vmatpush1.msra.mxu0 0.0
  %1023 = vmatprep.subr.mxu0 0.0
  %1024 = vmatpush1.msra.mxu0 0.0
  %1025 = vmatprep.subr.mxu0 0.0
  %1026 = vmatpush1.msra.mxu0 0.0
  %1027 = vmatprep.subr.mxu0 0.0
  %1028 = vmatpush1.msra.mxu0 0.0
  %1029 = vmatprep.subr.mxu0 0.0
  %1030 = vmatpush1.msra.mxu0 0.0
  %1031 = vmatprep.subr.mxu0 0.0
  %1032 = vmatpush1.msra.mxu0 0.0
  %1033 = vmatprep.subr.mxu0 0.0
  %1034 = vmatpush1.msra.mxu0 0.0
  %1035 = vmatprep.subr.mxu0 0.0
  %1036 = vmatpush1.msra.mxu0 0.0
  %1037 = vmatprep.subr.mxu0 0.0
  %1038 = vmatpush1.msra.mxu0 0.0
  %1039 = vmatprep.subr.mxu0 0.0
  %1040 = vmatpush1.msra.mxu0 0.0
  %1041 = vmatprep.subr.mxu0 0.0
  %1042 = vmatpush1.msra.mxu0 0.0
  %1043 = vmatprep.subr.mxu0 0.0
  %1044 = vmatpush1.msra.mxu0 0.0
  %1045 = vmatprep.subr.mxu0 0.0
  %1046 = vmatpush1.msra.mxu0 0.0
  %1047 = vmatprep.subr.mxu0 0.0
  %1048 = vmatpush1.msra.mxu0 0.0
  %1049 = vmatprep.subr.mxu0 0.0
  %1050 = vmatpush1.msra.mxu0 0.0
  %1051 = vmatprep.subr.mxu0 0.0
  %1052 = vmatpush1.msra.mxu0 0.0
  %1053 = vmatprep.subr.mxu0 0.0
  %1054 = vmatpush1.msra.mxu0 0.0
  %1055 = vmatprep.subr.mxu0 0.0
  %1056 = vmatpush1.msra.mxu0 0.0
  %1057 = vmatprep.subr.mxu0 0.0
  %1058 = vmatpush1.msra.mxu0 0.0
  %1059 = vmatprep.mubr.f32.mxu0 0.0
  %1060 = vmatmul.mubr.f32.gmra.mrb[0].mxu0 %v282
  %v1061 = vpop.f32.mrb[0].mxu0
  %v1062 = vadd.f32 %v988, %v1061
  %v1063 = vpop.f32.mrb[0].mxu0
  %1064 = vmatprep.mubr.f32.mxu0 0.0
  %1065 = vmatmul.mubr.f32.gmra.mrb[0].mxu0 %v382
  %v1066 = vpop.f32.mrb[0].mxu0
  %v1067 = vadd.f32 %v988, %v1066
  %v1068 = vpop.f32.mrb[0].mxu0
  %1069 = vmatprep.mubr.f32.mxu0 0.0
  %1070 = vmatmul.mubr.f32.gmra.mrb[0].mxu0 %v482
  %v1071 = vpop.f32.mrb[0].mxu0
  %v1072 = vadd.f32 %v988, %v1071
  %v1073 = vpop.f32.mrb[0].mxu0
  %1074 = vmatprep.mubr.f32.mxu0 0.0
  %1075 = vmatmul.mubr.f32.gmra.mrb[0].mxu0 %v582
  %v1076 = vpop.f32.mrb[0].mxu0
  %v1077 = vadd.f32 %v988, %v1076
  %v1078 = vpop.f32.mrb[0].mxu0
  %1079 = vmatprep.mubr.f32.mxu0 0.0
  %1080 = vmatmul.mubr.f32.gmra.mrb[0].mxu0 %v682
  %v1081 = vpop.f32.mrb[0].mxu0
  %v1082 = vadd.f32 %v988, %v1081
  %v1083 = vpop.f32.mrb[0].mxu0
  %1084 = vmatprep.mubr.f32.mxu0 0.0
  %1085 = vmatmul.mubr.f32.gmra.mrb[0].mxu0 %v782
  %v1086 = vpop.f32.mrb[0].mxu0
  %v1087 = vadd.f32 %v988, %v1086
  %v1088 = vpop.f32.mrb[0].mxu0
  %1089 = vmatprep.mubr.f32.mxu0 0.0
  %1090 = vmatmul.mubr.f32.gmra.mrb[0].mxu0 %v882
  %v1091 = vpop.f32.mrb[0].mxu0
  %v1092 = vadd.f32 %v988, %v1091
  %v1093 = vpop.f32.mrb[0].mxu0
  %1094 = vmatprep.mubr.f32.mxu0 0.0
  %1095 = vmatmul.mubr.f32.gmra.mrb[0].mxu0 %v993
  %v1096 = vpop.f32.mrb[0].mxu0
  %v1097 = vadd.f32 %v988, %v1096
  %v1098 = vpop.f32.mrb[0].mxu0
  %1099 = vdwg.mxu0
  %v1100 = vmax.f32 %v1062, 0.0
  %v1101 = vmax.f32 %v1067, 0.0
  %v1102 = vmax.f32 %v1072, 0.0
  %v1103 = vmax.f32 %v1077, 0.0
  %v1104 = vmax.f32 %v1082, 0.0
  %v1105 = vmax.f32 %v1087, 0.0
  %v1106 = vmax.f32 %v1092, 0.0
  %v1107 = vmax.f32 %v1097, 0.0
  %v1108 = vld [vmem:[%s6] sm:$0xff]
  %v1109 = vld [vmem:[%s6 + $0x8] sm:$0xff]
  %v1110 = vld [vmem:[%s6 + $0x10] sm:$0xff]
  %v1111 = vld [vmem:[%s6 + $0x18] sm:$0xff]
  %v1112 = vld [vmem:[%s6 + $0x20] sm:$0xff]
  %v1113 = vld [vmem:[%s6 + $0x28] sm:$0xff]
  %v1114 = vld [vmem:[%s6 + $0x30] sm:$0xff]
  %v1115 = vld [vmem:[%s6 + $0x38] sm:$0xff]
  %v1116 = vld [vmem:[%s7] sm:$0x1]
  %v1118 = vlaneseq
  %v1119 = vshrl.u32 %v1118, 7
  %v1120 = vsub.s32 0, %v1119
  %v1121 = vrot.slane %v1116, %v1120
  %vm1123 = vcmask 523264
  %v1125 = vsel %vm1123, %v1100, 0
  %v1128 = vsel %vm1123, %v1101, 0
  %v1131 = vsel %vm1123, %v1102, 0
  %v1134 = vsel %vm1123, %v1103, 0
  %v1137 = vsel %vm1123, %v1104, 0
  %v1140 = vsel %vm1123, %v1105, 0
  %v1143 = vsel %vm1123, %v1106, 0
  %v1146 = vsel %vm1123, %v1107, 0
  %1148 = vmatprep.subr.mxu0 0.0
  %1149 = vmatpush1.msra.mxu0 %v1108
  %1150 = vmatprep.subr.mxu0 0.0
  %1151 = vmatpush1.msra.mxu0 %v1109
  %1152 = vmatprep.subr.mxu0 0.0
  %1153 = vmatpush1.msra.mxu0 %v1110
  %1154 = vmatprep.subr.mxu0 0.0
  %1155 = vmatpush1.msra.mxu0 %v1111
  %1156 = vmatprep.subr.mxu0 0.0
  %1157 = vmatpush1.msra.mxu0 %v1112
  %1158 = vmatprep.subr.mxu0 0.0
  %1159 = vmatpush1.msra.mxu0 %v1113
  %1160 = vmatprep.subr.mxu0 0.0
  %1161 = vmatpush1.msra.mxu0 %v1114
  %1162 = vmatprep.subr.mxu0 0.0
  %1163 = vmatpush1.msra.mxu0 %v1115
  %1164 = vmatprep.subr.mxu0 0.0
  %1165 = vmatpush1.msra.mxu0 0.0
  %1166 = vmatprep.subr.mxu0 0.0
  %1167 = vmatpush1.msra.mxu0 0.0
  %1168 = vmatprep.subr.mxu0 0.0
  %1169 = vmatpush1.msra.mxu0 0.0
  %1170 = vmatprep.subr.mxu0 0.0
  %1171 = vmatpush1.msra.mxu0 0.0
  %1172 = vmatprep.subr.mxu0 0.0
  %1173 = vmatpush1.msra.mxu0 0.0
  %1174 = vmatprep.subr.mxu0 0.0
  %1175 = vmatpush1.msra.mxu0 0.0
  %1176 = vmatprep.subr.mxu0 0.0
  %1177 = vmatpush1.msra.mxu0 0.0
  %1178 = vmatprep.subr.mxu0 0.0
  %1179 = vmatpush1.msra.mxu0 0.0
  %1180 = vmatprep.subr.mxu0 0.0
  %1181 = vmatpush1.msra.mxu0 0.0
  %1182 = vmatprep.subr.mxu0 0.0
  %1183 = vmatpush1.msra.mxu0 0.0
  %1184 = vmatprep.subr.mxu0 0.0
  %1185 = vmatpush1.msra.mxu0 0.0
  %1186 = vmatprep.subr.mxu0 0.0
  %1187 = vmatpush1.msra.mxu0 0.0
  %1188 = vmatprep.subr.mxu0 0.0
  %1189 = vmatpush1.msra.mxu0 0.0
  %1190 = vmatprep.subr.mxu0 0.0
  %1191 = vmatpush1.msra.mxu0 0.0
  %1192 = vmatprep.subr.mxu0 0.0
  %1193 = vmatpush1.msra.mxu0 0.0
  %1194 = vmatprep.subr.mxu0 0.0
  %1195 = vmatpush1.msra.mxu0 0.0
  %1196 = vmatprep.subr.mxu0 0.0
  %1197 = vmatpush1.msra.mxu0 0.0
  %1198 = vmatprep.subr.mxu0 0.0
  %1199 = vmatpush1.msra.mxu0 0.0
  %1200 = vmatprep.subr.mxu0 0.0
  %1201 = vmatpush1.msra.mxu0 0.0
  %1202 = vmatprep.subr.mxu0 0.0
  %1203 = vmatpush1.msra.mxu0 0.0
  %1204 = vmatprep.subr.mxu0 0.0
  %1205 = vmatpush1.msra.mxu0 0.0
  %1206 = vmatprep.subr.mxu0 0.0
  %1207 = vmatpush1.msra.mxu0 0.0
  %1208 = vmatprep.subr.mxu0 0.0
  %1209 = vmatpush1.msra.mxu0 0.0
  %1210 = vmatprep.subr.mxu0 0.0
  %1211 = vmatpush1.msra.mxu0 0.0
  %1212 = vmatprep.mubr.f32.mxu0 0.0
  %1213 = vmatmul.mubr.f32.gmra.mrb[0].mxu0 %v1125
  %v1214 = vpop.f32.mrb[0].mxu0
  %v1215 = vadd.f32 %v1121, %v1214
  %v1216 = vpop.f32.mrb[0].mxu0
  %1217 = vmatprep.mubr.f32.mxu0 0.0
  %1218 = vmatmul.mubr.f32.gmra.mrb[0].mxu0 %v1128
  %v1219 = vpop.f32.mrb[0].mxu0
  %v1220 = vadd.f32 %v1121, %v1219
  %v1221 = vpop.f32.mrb[0].mxu0
  %1222 = vmatprep.mubr.f32.mxu0 0.0
  %1223 = vmatmul.mubr.f32.gmra.mrb[0].mxu0 %v1131
  %v1224 = vpop.f32.mrb[0].mxu0
  %v1225 = vadd.f32 %v1121, %v1224
  %v1226 = vpop.f32.mrb[0].mxu0
  %1227 = vmatprep.mubr.f32.mxu0 0.0
  %1228 = vmatmul.mubr.f32.gmra.mrb[0].mxu0 %v1134
  %v1229 = vpop.f32.mrb[0].mxu0
  %v1230 = vadd.f32 %v1121, %v1229
  %v1231 = vpop.f32.mrb[0].mxu0
  %1232 = vmatprep.mubr.f32.mxu0 0.0
  %1233 = vmatmul.mubr.f32.gmra.mrb[0].mxu0 %v1137
  %v1234 = vpop.f32.mrb[0].mxu0
  %v1235 = vadd.f32 %v1121, %v1234
  %v1236 = vpop.f32.mrb[0].mxu0
  %1237 = vmatprep.mubr.f32.mxu0 0.0
  %1238 = vmatmul.mubr.f32.gmra.mrb[0].mxu0 %v1140
  %v1239 = vpop.f32.mrb[0].mxu0
  %v1240 = vadd.f32 %v1121, %v1239
  %v1241 = vpop.f32.mrb[0].mxu0
  %1242 = vmatprep.mubr.f32.mxu0 0.0
  %1243 = vmatmul.mubr.f32.gmra.mrb[0].mxu0 %v1143
  %v1244 = vpop.f32.mrb[0].mxu0
  %v1245 = vadd.f32 %v1121, %v1244
  %v1246 = vpop.f32.mrb[0].mxu0
  %1247 = vmatprep.mubr.f32.mxu0 0.0
  %1248 = vmatmul.mubr.f32.gmra.mrb[0].mxu0 %v1146
  %v1249 = vpop.f32.mrb[0].mxu0
  %v1250 = vadd.f32 %v1121, %v1249
  %v1251 = vpop.f32.mrb[0].mxu0
  %1252 = vdwg.mxu0
  %1253 = vst [vmem:[%s8] sm:$0xff] %v1215
  %1254 = vst [vmem:[%s8 + $0x8] sm:$0xff] %v1220
  %1255 = vst [vmem:[%s8 + $0x10] sm:$0xff] %v1225
  %1256 = vst [vmem:[%s8 + $0x18] sm:$0xff] %v1230
  %1257 = vst [vmem:[%s8 + $0x20] sm:$0xff] %v1235
  %1258 = vst [vmem:[%s8 + $0x28] sm:$0xff] %v1240
  %1259 = vst [vmem:[%s8 + $0x30] sm:$0xff] %v1245
  %1260 = vst [vmem:[%s8 + $0x38] sm:$0xff] %v1250
  // Predicated region
  $region34: #{forecaster_forward.1} parent=0 // pred_check
    _
  $region35: #{forecaster_forward.1} parent=0 // pred_check_branch
    %1262 = sbr.rel (0) target = $region37
  $region36: #{forecaster_forward.1} parent=0 // pred_region
    _
  $region37: #{forecaster_forward.1} parent=0 // pred_fallthru
    _
  // Predicated region
  $region38: #{forecaster_forward.1} parent=0 // pred_check
    _
  $region39: #{forecaster_forward.1} parent=0 // pred_check_branch
    %1264 = sbr.rel (0) target = $region41
  $region40: #{forecaster_forward.1} parent=0 // pred_region
    _
  $region41: #{forecaster_forward.1} parent=0 // pred_fallthru
    _

</llo_original>
